<compile_context>
chip_gen: v7x
topology: tpu7x:2x2x1
jax: 0.10.0
libtpu: 0.0.40
codegen_flags: <defaults>
</compile_context>

<pallas_src>
import jax
import jax.numpy as jnp
from jax.experimental import pallas as pl
from jax.experimental.pallas import tpu as pltpu

_BN_EPS = 1e-5


def _fp_kernel(xyz1_ref, xyz2_ref, pts1_ref, pts2_ref, *refs):
    out_ref = refs[-1]
    wb = refs[:-1]

    x1 = xyz1_ref[0]      # (TILE_N, 3)  query positions (channels-last)
    x2c = xyz2_ref[0]     # (3, S)       sampled positions (channels-first)
    p1 = pts1_ref[0]      # (TILE_N, D1) skip features
    p2 = pts2_ref[0]      # (S, D2)      features to interpolate

    tile_n = x1.shape[0]
    s = x2c.shape[1]

    # squared distances: |x1|^2 + |x2|^2 - 2 * x1.x2  -> (TILE_N, S)
    sq1 = jnp.sum(x1 * x1, axis=-1, keepdims=True)            # (TILE_N, 1)
    sq2 = jnp.sum(x2c * x2c, axis=0, keepdims=True)            # (1, S)
    cross = jnp.dot(x1, x2c, preferred_element_type=jnp.float32)
    d = jnp.maximum(sq1 + sq2 - 2.0 * cross, 0.0)

    # 3 nearest neighbours via iterative min + one-hot masking (no sort/gather).
    lane = jax.lax.broadcasted_iota(jnp.int32, (tile_n, s), 1)
    w_int = jnp.zeros((tile_n, s), jnp.float32)
    norm = jnp.zeros((tile_n, 1), jnp.float32)
    for _ in range(3):                                          # static, 3 iters
        m = jnp.min(d, axis=-1, keepdims=True)                  # (TILE_N, 1)
        sel = jnp.min(jnp.where(d == m, lane, s), axis=-1, keepdims=True)
        one_hot = lane == sel
        recip = 1.0 / (m + 1e-8)
        w_int = w_int + jnp.where(one_hot, recip, 0.0)
        norm = norm + recip
        d = jnp.where(one_hot, jnp.inf, d)
    w_int = w_int / norm                                        # (TILE_N, S)

    # inverse-distance interpolation as a sparse-weight matmul on the MXU.
    interp = jnp.dot(w_int, p2, preferred_element_type=jnp.float32)  # (TILE_N, D2)

    # layer 1: concat([points1, interp]) @ W folded into two matmuls.
    w1a, w1b, b1 = wb[0][...], wb[1][...], wb[2][...]
    h = (jnp.dot(p1, w1a, preferred_element_type=jnp.float32)
         + jnp.dot(interp, w1b, preferred_element_type=jnp.float32)
         + b1)
    h = jnp.maximum(h, 0.0)

    # remaining folded conv+bn+relu layers
    rest = wb[3:]
    for li in range(len(rest) // 2):
        w = rest[2 * li][...]
        b = rest[2 * li + 1][...]
        h = jnp.maximum(jnp.dot(h, w, preferred_element_type=jnp.float32) + b, 0.0)

    out_ref[0] = h.astype(out_ref.dtype)


def _fold_conv_bn(layer):
    """Fold Conv1d(k=1) + BatchNorm1d (running stats) into (C_in,C_out) W, (1,C_out) b."""
    scale = layer["gamma"] * jax.lax.rsqrt(layer["var"] + _BN_EPS)      # (C_out,)
    w_eff = (layer["conv_w"] * scale[:, None]).T                        # (C_in, C_out)
    b_eff = ((layer["conv_b"] - layer["mean"]) * scale + layer["beta"])[None, :]
    return w_eff.astype(jnp.float32), b_eff.astype(jnp.float32)


def pointnet_feature_propagation(xyz1, xyz2, points1, points2, layers, *, tile_n=512):
    """xyz1 (B,3,N), xyz2 (B,3,S), points1 (B,D1,N), points2 (B,D2,S) -> (B,C_out,N)."""
    B, _, N = xyz1.shape
    S = xyz2.shape[2]
    D1 = points1.shape[1]
    D2 = points2.shape[1]

    # TODO(synk): the S == 1 repeat path and the points1 is None path of the
    # torch module are not implemented (this kernel requires S >= 3 and skip feats).
    assert S >= 3 and points1 is not None

    x1t = jnp.transpose(xyz1, (0, 2, 1)).astype(jnp.float32)      # (B, N, 3)
    p1t = jnp.transpose(points1, (0, 2, 1)).astype(jnp.float32)   # (B, N, D1)
    p2t = jnp.transpose(points2, (0, 2, 1)).astype(jnp.float32)   # (B, S, D2)
    x2c = xyz2.astype(jnp.float32)                                # (B, 3, S) stays channels-first

    folded = [_fold_conv_bn(l) for l in layers]
    w1, b1 = folded[0]
    assert w1.shape[0] == D1 + D2, "first MLP layer in_channel must equal D1 + D2"
    flat_params = [w1[:D1], w1[D1:], b1]
    for w, b in folded[1:]:
        flat_params += [w, b]
    out_c = folded[-1][0].shape[1]

    tile_n = min(tile_n, N)
    assert N % tile_n == 0, "N must be divisible by tile_n"
    grid = (B, N // tile_n)

    in_specs = [
        pl.BlockSpec((1, tile_n, 3), lambda b, n: (b, n, 0)),     # xyz1: tiled over N
        pl.BlockSpec((1, 3, S), lambda b, n: (b, 0, 0)),          # xyz2: resident per batch
        pl.BlockSpec((1, tile_n, D1), lambda b, n: (b, n, 0)),    # points1: tiled over N
        pl.BlockSpec((1, S, D2), lambda b, n: (b, 0, 0)),         # points2: resident per batch
    ]
    # folded weights / biases pinned in VMEM across the whole grid.
    for p in flat_params:
        in_specs.append(pl.BlockSpec(p.shape, lambda b, n: (0, 0)))

    out_specs = pl.BlockSpec((1, tile_n, out_c), lambda b, n: (b, n, 0))

    flops = int(2 * B * N * (3 * S + S * D2)
                + 2 * B * N * sum(int(w.shape[0]) * int(w.shape[1]) for w, _ in folded))
    bytes_accessed = int(4 * (x1t.size + p1t.size + x2c.size + p2t.size
                              + B * N * out_c + sum(p.size for p in flat_params)))

    out = pl.pallas_call(
        _fp_kernel,
        out_shape=jax.ShapeDtypeStruct((B, N, out_c), jnp.float32),
        grid_spec=pltpu.PrefetchScalarGridSpec(
            num_scalar_prefetch=0,
            grid=grid,
            in_specs=in_specs,
            out_specs=out_specs,
        ),
        compiler_params=pltpu.CompilerParams(
            dimension_semantics=("parallel", "parallel"),
            vmem_limit_bytes=32 * 1024 * 1024,
        ),
        cost_estimate=pl.CostEstimate(
            flops=flops, transcendentals=3 * B * N, bytes_accessed=bytes_accessed),
    )(x1t, x2c, p1t, p2t, *flat_params)

    return jnp.transpose(out, (0, 2, 1))     # (B, C_out, N)


def init_layers(key, in_channel, mlp):
    """Deterministic Conv1d(k=1) + BatchNorm1d parameters (inference-mode stats)."""
    layers = []
    last = in_channel
    for out_c in mlp:
        key, kw, kb, kg, kbe, km, kv = jax.random.split(key, 7)
        bound = 1.0 / (last ** 0.5)
        layers.append(dict(
            conv_w=jax.random.uniform(kw, (out_c, last), jnp.float32, -bound, bound),
            conv_b=jax.random.uniform(kb, (out_c,), jnp.float32, -bound, bound),
            gamma=jax.random.uniform(kg, (out_c,), jnp.float32, 0.5, 1.5),
            beta=jax.random.uniform(kbe, (out_c,), jnp.float32, -0.5, 0.5),
            mean=0.1 * jax.random.normal(km, (out_c,), jnp.float32),
            var=jax.random.uniform(kv, (out_c,), jnp.float32, 0.5, 1.5),
        ))
        last = out_c
    return layers


def reference(xyz1, xyz2, points1, points2, layers):
    """Pure-JAX mirror of the torch forward (BatchNorm in inference mode)."""
    x1 = jnp.transpose(xyz1, (0, 2, 1))       # (B, N, 3)
    x2 = jnp.transpose(xyz2, (0, 2, 1))       # (B, S, 3)
    p2 = jnp.transpose(points2, (0, 2, 1))    # (B, S, D2)
    dists = jnp.sum((x1[:, :, None, :] - x2[:, None, :, :]) ** 2, axis=-1)   # (B,N,S)
    idx = jnp.argsort(dists, axis=-1)[:, :, :3]                               # (B,N,3)
    d3 = jnp.take_along_axis(dists, idx, axis=-1)
    recip = 1.0 / (d3 + 1e-8)
    weight = recip / jnp.sum(recip, axis=2, keepdims=True)                    # (B,N,3)
    gathered = jax.vmap(lambda pts, ids: pts[ids])(p2, idx)                   # (B,N,3,D2)
    interp = jnp.sum(gathered * weight[..., None], axis=2)                    # (B,N,D2)
    p1 = jnp.transpose(points1, (0, 2, 1))                                    # (B,N,D1)
    x = jnp.transpose(jnp.concatenate([p1, interp], axis=-1), (0, 2, 1))      # (B,C,N)
    for layer in layers:
        y = (jnp.einsum("oc,bcn->bon", layer["conv_w"], x)
             + layer["conv_b"][None, :, None])
        scale = layer["gamma"] / jnp.sqrt(layer["var"] + _BN_EPS)
        y = ((y - layer["mean"][None, :, None]) * scale[None, :, None]
             + layer["beta"][None, :, None])
        x = jnp.maximum(y, 0.0)
    return x


if __name__ == "__main__":
    key = jax.random.PRNGKey(0)
    k1, k2, k3, k4, k5 = jax.random.split(key, 5)

    B, N, S = 2, 64, 16
    D1, D2 = 16, 16
    mlp = [32, 16]
    in_channel = D1 + D2

    xyz1 = jax.random.normal(k1, (B, 3, N), jnp.float32)
    xyz2 = jax.random.normal(k2, (B, 3, S), jnp.float32)
    points1 = jax.random.normal(k3, (B, D1, N), jnp.float32)
    points2 = jax.random.normal(k4, (B, D2, S), jnp.float32)
    layers = init_layers(k5, in_channel, mlp)

    out = pointnet_feature_propagation(xyz1, xyz2, points1, points2, layers,
                                       tile_n=32)
    out = jax.block_until_ready(out)

    ref = reference(xyz1, xyz2, points1, points2, layers)
    assert out.shape == (B, mlp[-1], N)
    assert jnp.allclose(out, ref, atol=2e-3, rtol=2e-3), float(
        jnp.max(jnp.abs(out - ref)))
    print("KERNEL_OK")
</pallas_src>

<mosaic_0001>
module attributes {stable_mosaic.version = 11 : i64} {
  func.func @_fp_kernel(%arg0: i32, %arg1: i32, %arg2: memref<1x32x3xf32, #tpu.memory_space<vmem>>, %arg3: memref<1x3x16xf32, #tpu.memory_space<vmem>>, %arg4: memref<1x32x16xf32, #tpu.memory_space<vmem>>, %arg5: memref<1x16x16xf32, #tpu.memory_space<vmem>>, %arg6: memref<16x32xf32, #tpu.memory_space<vmem>>, %arg7: memref<16x32xf32, #tpu.memory_space<vmem>>, %arg8: memref<1x32xf32, #tpu.memory_space<vmem>>, %arg9: memref<32x16xf32, #tpu.memory_space<vmem>>, %arg10: memref<1x16xf32, #tpu.memory_space<vmem>>, %arg11: memref<1x32x16xf32, #tpu.memory_space<vmem>>) attributes {dimension_semantics = [#tpu.dimension_semantics<parallel>, #tpu.dimension_semantics<parallel>], iteration_bounds = array<i64: 2, 2>, scalar_prefetch = 0 : i64, scratch_operands = 0 : i64, tpu.core_type = #tpu.core_type<tc>, window_params = [{transform_indices = @transform_0, window_bounds = array<i64: 1, 32, 3>}, {transform_indices = @transform_1, window_bounds = array<i64: 1, 3, 16>}, {transform_indices = @transform_2, window_bounds = array<i64: 1, 32, 16>}, {transform_indices = @transform_3, window_bounds = array<i64: 1, 16, 16>}, {pipeline_mode = #tpu.pipeline_mode<synchronous>, transform_indices = @transform_4, window_bounds = array<i64: 16, 32>}, {pipeline_mode = #tpu.pipeline_mode<synchronous>, transform_indices = @transform_5, window_bounds = array<i64: 16, 32>}, {pipeline_mode = #tpu.pipeline_mode<synchronous>, transform_indices = @transform_6, window_bounds = array<i64: 1, 32>}, {pipeline_mode = #tpu.pipeline_mode<synchronous>, transform_indices = @transform_7, window_bounds = array<i64: 32, 16>}, {pipeline_mode = #tpu.pipeline_mode<synchronous>, transform_indices = @transform_8, window_bounds = array<i64: 1, 16>}, {transform_indices = @transform_9, window_bounds = array<i64: 1, 32, 16>}]} {
    %c0 = arith.constant 0 : index
    %c0_0 = arith.constant 0 : index
    %c0_1 = arith.constant 0 : index
    %0 = vector.load %arg2[%c0, %c0_0, %c0_1] : memref<1x32x3xf32, #tpu.memory_space<vmem>>, vector<1x32x3xf32>
    %1 = vector.shape_cast %0 : vector<1x32x3xf32> to vector<32x3xf32>
    %c0_2 = arith.constant 0 : index
    %c0_3 = arith.constant 0 : index
    %c0_4 = arith.constant 0 : index
    %2 = vector.load %arg3[%c0_2, %c0_3, %c0_4] : memref<1x3x16xf32, #tpu.memory_space<vmem>>, vector<1x3x16xf32>
    %3 = vector.shape_cast %2 : vector<1x3x16xf32> to vector<3x16xf32>
    %c0_5 = arith.constant 0 : index
    %c0_6 = arith.constant 0 : index
    %c0_7 = arith.constant 0 : index
    %4 = vector.load %arg4[%c0_5, %c0_6, %c0_7] : memref<1x32x16xf32, #tpu.memory_space<vmem>>, vector<1x32x16xf32>
    %5 = vector.shape_cast %4 : vector<1x32x16xf32> to vector<32x16xf32>
    %c0_8 = arith.constant 0 : index
    %c0_9 = arith.constant 0 : index
    %c0_10 = arith.constant 0 : index
    %6 = vector.load %arg5[%c0_8, %c0_9, %c0_10] : memref<1x16x16xf32, #tpu.memory_space<vmem>>, vector<1x16x16xf32>
    %7 = vector.shape_cast %6 : vector<1x16x16xf32> to vector<16x16xf32>
    %8 = arith.mulf %1, %1 : vector<32x3xf32>
    %cst = arith.constant dense<0.000000e+00> : vector<32xf32>
    %9 = vector.multi_reduction <add>, %8, %cst [1] : vector<32x3xf32> to vector<32xf32>
    %10 = vector.shape_cast %9 : vector<32xf32> to vector<32x1xf32>
    %11 = arith.mulf %3, %3 : vector<3x16xf32>
    %cst_11 = arith.constant dense<0.000000e+00> : vector<16xf32>
    %12 = vector.multi_reduction <add>, %11, %cst_11 [0] : vector<3x16xf32> to vector<16xf32>
    %13 = vector.shape_cast %12 : vector<16xf32> to vector<1x16xf32>
    %cst_12 = arith.constant dense<0.000000e+00> : vector<32x16xf32>
    %14 = tpu.matmul %1, %3, %cst_12 {dimension_numbers = #tpu.dot_dimension_numbers<[1], [0], [0], [1], [0, 0, 1, 1], [], []>} : vector<32x3xf32>, vector<3x16xf32>, vector<32x16xf32> -> vector<32x16xf32>
    %15 = vector.broadcast %10 : vector<32x1xf32> to vector<32x16xf32>
    %16 = vector.broadcast %13 : vector<1x16xf32> to vector<32x16xf32>
    %17 = arith.addf %15, %16 : vector<32x16xf32>
    %cst_13 = arith.constant 2.000000e+00 : f32
    %18 = vector.broadcast %cst_13 : f32 to vector<32x16xf32>
    %19 = arith.mulf %18, %14 : vector<32x16xf32>
    %20 = arith.subf %17, %19 : vector<32x16xf32>
    %cst_14 = arith.constant 0.000000e+00 : f32
    %21 = vector.broadcast %cst_14 : f32 to vector<32x16xf32>
    %22 = arith.maximumf %20, %21 : vector<32x16xf32>
    %23 = tpu.iota {dimensions = array<i32: 1>} : vector<32x16xi32>
    %cst_15 = arith.constant 0.000000e+00 : f32
    %24 = vector.broadcast %cst_15 : f32 to vector<32x16xf32>
    %cst_16 = arith.constant 0.000000e+00 : f32
    %25 = vector.broadcast %cst_16 : f32 to vector<32x1xf32>
    %cst_17 = arith.constant dense<0x7F800000> : vector<32xf32>
    %26 = vector.multi_reduction <minimumf>, %22, %cst_17 [1] : vector<32x16xf32> to vector<32xf32>
    %27 = vector.shape_cast %26 : vector<32xf32> to vector<32x1xf32>
    %28 = vector.broadcast %27 : vector<32x1xf32> to vector<32x16xf32>
    %29 = arith.cmpf oeq, %22, %28 : vector<32x16xf32>
    %c16_i32 = arith.constant 16 : i32
    %30 = vector.broadcast %c16_i32 : i32 to vector<32x16xi32>
    %31 = arith.select %29, %23, %30 : vector<32x16xi1>, vector<32x16xi32>
    %cst_18 = arith.constant dense<2147483647> : vector<32xi32>
    %32 = vector.multi_reduction <minsi>, %31, %cst_18 [1] : vector<32x16xi32> to vector<32xi32>
    %33 = vector.shape_cast %32 : vector<32xi32> to vector<32x1xi32>
    %34 = vector.broadcast %33 : vector<32x1xi32> to vector<32x16xi32>
    %35 = arith.cmpi eq, %23, %34 : vector<32x16xi32>
    %cst_19 = arith.constant 9.99999993E-9 : f32
    %36 = vector.broadcast %cst_19 : f32 to vector<32x1xf32>
    %37 = arith.addf %27, %36 : vector<32x1xf32>
    %cst_20 = arith.constant 1.000000e+00 : f32
    %38 = vector.broadcast %cst_20 : f32 to vector<32x1xf32>
    %39 = arith.divf %38, %37 : vector<32x1xf32>
    %cst_21 = arith.constant 0.000000e+00 : f32
    %40 = vector.shape_cast %39 : vector<32x1xf32> to vector<32x1xf32>
    %41 = vector.broadcast %40 : vector<32x1xf32> to vector<32x16xf32>
    %42 = vector.broadcast %cst_21 : f32 to vector<32x16xf32>
    %43 = arith.select %35, %41, %42 : vector<32x16xi1>, vector<32x16xf32>
    %44 = arith.addf %24, %43 : vector<32x16xf32>
    %45 = arith.addf %25, %39 : vector<32x1xf32>
    %cst_22 = arith.constant 0x7F800000 : f32
    %46 = vector.broadcast %cst_22 : f32 to vector<32x16xf32>
    %47 = arith.select %35, %46, %22 : vector<32x16xi1>, vector<32x16xf32>
    %cst_23 = arith.constant dense<0x7F800000> : vector<32xf32>
    %48 = vector.multi_reduction <minimumf>, %47, %cst_23 [1] : vector<32x16xf32> to vector<32xf32>
    %49 = vector.shape_cast %48 : vector<32xf32> to vector<32x1xf32>
    %50 = vector.broadcast %49 : vector<32x1xf32> to vector<32x16xf32>
    %51 = arith.cmpf oeq, %47, %50 : vector<32x16xf32>
    %c16_i32_24 = arith.constant 16 : i32
    %52 = vector.broadcast %c16_i32_24 : i32 to vector<32x16xi32>
    %53 = arith.select %51, %23, %52 : vector<32x16xi1>, vector<32x16xi32>
    %cst_25 = arith.constant dense<2147483647> : vector<32xi32>
    %54 = vector.multi_reduction <minsi>, %53, %cst_25 [1] : vector<32x16xi32> to vector<32xi32>
    %55 = vector.shape_cast %54 : vector<32xi32> to vector<32x1xi32>
    %56 = vector.broadcast %55 : vector<32x1xi32> to vector<32x16xi32>
    %57 = arith.cmpi eq, %23, %56 : vector<32x16xi32>
    %cst_26 = arith.constant 9.99999993E-9 : f32
    %58 = vector.broadcast %cst_26 : f32 to vector<32x1xf32>
    %59 = arith.addf %49, %58 : vector<32x1xf32>
    %cst_27 = arith.constant 1.000000e+00 : f32
    %60 = vector.broadcast %cst_27 : f32 to vector<32x1xf32>
    %61 = arith.divf %60, %59 : vector<32x1xf32>
    %cst_28 = arith.constant 0.000000e+00 : f32
    %62 = vector.shape_cast %61 : vector<32x1xf32> to vector<32x1xf32>
    %63 = vector.broadcast %62 : vector<32x1xf32> to vector<32x16xf32>
    %64 = vector.broadcast %cst_28 : f32 to vector<32x16xf32>
    %65 = arith.select %57, %63, %64 : vector<32x16xi1>, vector<32x16xf32>
    %66 = arith.addf %44, %65 : vector<32x16xf32>
    %67 = arith.addf %45, %61 : vector<32x1xf32>
    %cst_29 = arith.constant 0x7F800000 : f32
    %68 = vector.broadcast %cst_29 : f32 to vector<32x16xf32>
    %69 = arith.select %57, %68, %47 : vector<32x16xi1>, vector<32x16xf32>
    %cst_30 = arith.constant dense<0x7F800000> : vector<32xf32>
    %70 = vector.multi_reduction <minimumf>, %69, %cst_30 [1] : vector<32x16xf32> to vector<32xf32>
    %71 = vector.shape_cast %70 : vector<32xf32> to vector<32x1xf32>
    %72 = vector.broadcast %71 : vector<32x1xf32> to vector<32x16xf32>
    %73 = arith.cmpf oeq, %69, %72 : vector<32x16xf32>
    %c16_i32_31 = arith.constant 16 : i32
    %74 = vector.broadcast %c16_i32_31 : i32 to vector<32x16xi32>
    %75 = arith.select %73, %23, %74 : vector<32x16xi1>, vector<32x16xi32>
    %cst_32 = arith.constant dense<2147483647> : vector<32xi32>
    %76 = vector.multi_reduction <minsi>, %75, %cst_32 [1] : vector<32x16xi32> to vector<32xi32>
    %77 = vector.shape_cast %76 : vector<32xi32> to vector<32x1xi32>
    %78 = vector.broadcast %77 : vector<32x1xi32> to vector<32x16xi32>
    %79 = arith.cmpi eq, %23, %78 : vector<32x16xi32>
    %cst_33 = arith.constant 9.99999993E-9 : f32
    %80 = vector.broadcast %cst_33 : f32 to vector<32x1xf32>
    %81 = arith.addf %71, %80 : vector<32x1xf32>
    %cst_34 = arith.constant 1.000000e+00 : f32
    %82 = vector.broadcast %cst_34 : f32 to vector<32x1xf32>
    %83 = arith.divf %82, %81 : vector<32x1xf32>
    %cst_35 = arith.constant 0.000000e+00 : f32
    %84 = vector.shape_cast %83 : vector<32x1xf32> to vector<32x1xf32>
    %85 = vector.broadcast %84 : vector<32x1xf32> to vector<32x16xf32>
    %86 = vector.broadcast %cst_35 : f32 to vector<32x16xf32>
    %87 = arith.select %79, %85, %86 : vector<32x16xi1>, vector<32x16xf32>
    %88 = arith.addf %66, %87 : vector<32x16xf32>
    %89 = arith.addf %67, %83 : vector<32x1xf32>
    %90 = vector.broadcast %89 : vector<32x1xf32> to vector<32x16xf32>
    %91 = arith.divf %88, %90 : vector<32x16xf32>
    %cst_36 = arith.constant dense<0.000000e+00> : vector<32x16xf32>
    %92 = tpu.matmul %91, %7, %cst_36 {dimension_numbers = #tpu.dot_dimension_numbers<[1], [0], [0], [1], [0, 0, 1, 1], [], []>} : vector<32x16xf32>, vector<16x16xf32>, vector<32x16xf32> -> vector<32x16xf32>
    %c0_37 = arith.constant 0 : index
    %c0_38 = arith.constant 0 : index
    %93 = vector.load %arg6[%c0_37, %c0_38] : memref<16x32xf32, #tpu.memory_space<vmem>>, vector<16x32xf32>
    %c0_39 = arith.constant 0 : index
    %c0_40 = arith.constant 0 : index
    %94 = vector.load %arg7[%c0_39, %c0_40] : memref<16x32xf32, #tpu.memory_space<vmem>>, vector<16x32xf32>
    %c0_41 = arith.constant 0 : index
    %c0_42 = arith.constant 0 : index
    %95 = vector.load %arg8[%c0_41, %c0_42] : memref<1x32xf32, #tpu.memory_space<vmem>>, vector<1x32xf32>
    %cst_43 = arith.constant dense<0.000000e+00> : vector<32x32xf32>
    %96 = tpu.matmul %5, %93, %cst_43 {dimension_numbers = #tpu.dot_dimension_numbers<[1], [0], [0], [1], [0, 0, 1, 1], [], []>} : vector<32x16xf32>, vector<16x32xf32>, vector<32x32xf32> -> vector<32x32xf32>
    %cst_44 = arith.constant dense<0.000000e+00> : vector<32x32xf32>
    %97 = tpu.matmul %92, %94, %cst_44 {dimension_numbers = #tpu.dot_dimension_numbers<[1], [0], [0], [1], [0, 0, 1, 1], [], []>} : vector<32x16xf32>, vector<16x32xf32>, vector<32x32xf32> -> vector<32x32xf32>
    %98 = arith.addf %96, %97 : vector<32x32xf32>
    %99 = vector.broadcast %95 : vector<1x32xf32> to vector<32x32xf32>
    %100 = arith.addf %98, %99 : vector<32x32xf32>
    %cst_45 = arith.constant 0.000000e+00 : f32
    %101 = vector.broadcast %cst_45 : f32 to vector<32x32xf32>
    %102 = arith.maximumf %100, %101 : vector<32x32xf32>
    %c0_46 = arith.constant 0 : index
    %c0_47 = arith.constant 0 : index
    %103 = vector.load %arg9[%c0_46, %c0_47] : memref<32x16xf32, #tpu.memory_space<vmem>>, vector<32x16xf32>
    %c0_48 = arith.constant 0 : index
    %c0_49 = arith.constant 0 : index
    %104 = vector.load %arg10[%c0_48, %c0_49] : memref<1x16xf32, #tpu.memory_space<vmem>>, vector<1x16xf32>
    %cst_50 = arith.constant dense<0.000000e+00> : vector<32x16xf32>
    %105 = tpu.matmul %102, %103, %cst_50 {dimension_numbers = #tpu.dot_dimension_numbers<[1], [0], [0], [1], [0, 0, 1, 1], [], []>} : vector<32x32xf32>, vector<32x16xf32>, vector<32x16xf32> -> vector<32x16xf32>
    %106 = vector.broadcast %104 : vector<1x16xf32> to vector<32x16xf32>
    %107 = arith.addf %105, %106 : vector<32x16xf32>
    %cst_51 = arith.constant 0.000000e+00 : f32
    %108 = vector.broadcast %cst_51 : f32 to vector<32x16xf32>
    %109 = arith.maximumf %107, %108 : vector<32x16xf32>
    %c0_52 = arith.constant 0 : index
    %c0_53 = arith.constant 0 : index
    %c0_54 = arith.constant 0 : index
    %110 = vector.load %arg11[%c0_52, %c0_53, %c0_54] : memref<1x32x16xf32, #tpu.memory_space<vmem>>, vector<1x32x16xf32>
    %111 = vector.shape_cast %110 : vector<1x32x16xf32> to vector<32x16xf32>
    %112 = vector.shape_cast %109 : vector<32x16xf32> to vector<1x32x16xf32>
    tpu.vector_store %arg11[%c0_52, %c0_53, %c0_54], %112 {strides = array<i32>} : memref<1x32x16xf32, #tpu.memory_space<vmem>>, vector<1x32x16xf32>,
    return
  }
  func.func @transform_0(%arg0: i32, %arg1: i32) -> (i32, i32, i32) {
    %c0_i32 = arith.constant 0 : i32
    %c0_i32_0 = arith.constant 0 : i32
    return %arg0, %arg1, %c0_i32 : i32, i32, i32
  }
  func.func @transform_1(%arg0: i32, %arg1: i32) -> (i32, i32, i32) {
    %c0_i32 = arith.constant 0 : i32
    %c0_i32_0 = arith.constant 0 : i32
    %c0_i32_1 = arith.constant 0 : i32
    return %arg0, %c0_i32, %c0_i32_0 : i32, i32, i32
  }
  func.func @transform_2(%arg0: i32, %arg1: i32) -> (i32, i32, i32) {
    %c0_i32 = arith.constant 0 : i32
    %c0_i32_0 = arith.constant 0 : i32
    return %arg0, %arg1, %c0_i32 : i32, i32, i32
  }
  func.func @transform_3(%arg0: i32, %arg1: i32) -> (i32, i32, i32) {
    %c0_i32 = arith.constant 0 : i32
    %c0_i32_0 = arith.constant 0 : i32
    %c0_i32_1 = arith.constant 0 : i32
    return %arg0, %c0_i32, %c0_i32_0 : i32, i32, i32
  }
  func.func @transform_4(%arg0: i32, %arg1: i32) -> (i32, i32) {
    %c0_i32 = arith.constant 0 : i32
    %c0_i32_0 = arith.constant 0 : i32
    %c0_i32_1 = arith.constant 0 : i32
    return %c0_i32, %c0_i32_0 : i32, i32
  }
  func.func @transform_5(%arg0: i32, %arg1: i32) -> (i32, i32) {
    %c0_i32 = arith.constant 0 : i32
    %c0_i32_0 = arith.constant 0 : i32
    %c0_i32_1 = arith.constant 0 : i32
    return %c0_i32, %c0_i32_0 : i32, i32
  }
  func.func @transform_6(%arg0: i32, %arg1: i32) -> (i32, i32) {
    %c0_i32 = arith.constant 0 : i32
    %c0_i32_0 = arith.constant 0 : i32
    %c0_i32_1 = arith.constant 0 : i32
    return %c0_i32, %c0_i32_0 : i32, i32
  }
  func.func @transform_7(%arg0: i32, %arg1: i32) -> (i32, i32) {
    %c0_i32 = arith.constant 0 : i32
    %c0_i32_0 = arith.constant 0 : i32
    %c0_i32_1 = arith.constant 0 : i32
    return %c0_i32, %c0_i32_0 : i32, i32
  }
  func.func @transform_8(%arg0: i32, %arg1: i32) -> (i32, i32) {
    %c0_i32 = arith.constant 0 : i32
    %c0_i32_0 = arith.constant 0 : i32
    %c0_i32_1 = arith.constant 0 : i32
    return %c0_i32, %c0_i32_0 : i32, i32
  }
  func.func @transform_9(%arg0: i32, %arg1: i32) -> (i32, i32, i32) {
    %c0_i32 = arith.constant 0 : i32
    %c0_i32_0 = arith.constant 0 : i32
    return %arg0, %arg1, %c0_i32 : i32, i32, i32
  }
}

</mosaic_0001>

<llo_original>
// kernel: tpu_custom_call.1
$region0: #{tpu_custom_call.1}
  #allocation0 [shape = 'u32[]', space=smem, size = 0x4, offset = 0x4, fixed_abs, tag = 'smem constant byte address 0x4 - core index']
  #allocation1 [shape = 'u32[144,128]{1,0:T(1,128)}', space=vmem, size = 0x12000, scoped, tag = 'internal scratch']
  %s0 = inlined_call_operand.vmem [shape: f32[2,64,3], index: 0, kind: input, shape index: {}]
  %s1 = inlined_call_operand.vmem [shape: f32[2,3,16], index: 1, kind: input, shape index: {}]
  %s2 = inlined_call_operand.vmem [shape: f32[2,64,16], index: 2, kind: input, shape index: {}]
  %s3 = inlined_call_operand.vmem [shape: f32[2,16,16], index: 3, kind: input, shape index: {}]
  %s4 = inlined_call_operand.vmem [shape: f32[16,32], index: 4, kind: input, shape index: {}]
  %s5 = inlined_call_operand.vmem [shape: f32[16,32], index: 5, kind: input, shape index: {}]
  %s6 = inlined_call_operand.vmem [shape: f32[1,32], index: 6, kind: input, shape index: {}]
  %s7 = inlined_call_operand.vmem [shape: f32[32,16], index: 7, kind: input, shape index: {}]
  %s8 = inlined_call_operand.vmem [shape: f32[1,16], index: 8, kind: input, shape index: {}]
  %s9 = inlined_call_operand.vmem [shape: f32[2,64,16], index: 9, kind: output, shape index: {}]
  %s10 = sld [smem:[#allocation0]]
  $region69: #{tpu_custom_call.1} parent=0
    _
  %s12 = ssub.s32 1, %s10
  %s13 = scalar_select 0, %s12, %s10
  loop: start=0, step=1, limit=6
  $region2: #{tpu_custom_call.1} parent=0 // loop_pre_header
    _
  $region3: #{tpu_custom_call.1} parent=0 // loop_header
    %s15 = sphi 0, %s19
    %p16 = scmp.ge.s32.totalorder %s15, 6
    %s22 = sphi 0, %s34
    %s23 = sphi 0, %s30
    %s24 = sphi 0, %s22
    %s25 = sphi 0, %s23
    %s26 = sphi 0, %s24
    %s27 = sphi 0, %s25
    %s39 = sphi 0, %s41
    %s42 = sphi 0, %s39
    %s43 = sphi 0, %s42
    %s59 = sphi 0, %s43
    %s65 = sphi 0, %s67
    %s68 = sphi 0, %s65
    %s69 = sphi 0, %s68
    %s85 = sphi 0, %s69
    %s93 = sphi 0, %s95
    %s96 = sphi 0, %s93
    %s97 = sphi 0, %s96
    %s113 = sphi 0, %s97
    %s119 = sphi 0, %s121
    %s122 = sphi 0, %s119
    %s123 = sphi 0, %s122
    %s139 = sphi 0, %s123
    %s143 = sphi 0, %s143
    %s145 = sphi 0, %s143
    %s146 = sphi 0, %s145
    %s160 = sphi 0, %s146
    %s164 = sphi 0, %s164
    %s166 = sphi 0, %s164
    %s167 = sphi 0, %s166
    %s181 = sphi 0, %s167
    %s185 = sphi 0, %s185
    %s187 = sphi 0, %s185
    %s188 = sphi 0, %s187
    %s202 = sphi 0, %s188
    %s206 = sphi 0, %s206
    %s208 = sphi 0, %s206
    %s209 = sphi 0, %s208
    %s223 = sphi 0, %s209
    %s227 = sphi 0, %s227
    %s229 = sphi 0, %s227
    %s230 = sphi 0, %s229
    %s244 = sphi 0, %s230
    %s252 = sphi 0, %s254
    %s255 = sphi 0, %s252
    %s256 = sphi 0, %s255
    %s272 = sphi 0, %s256
  $region4: #{tpu_custom_call.1} parent=0 // loop_header_branch
    %18 = sbr.rel (%p16) target = $region8
  $region5: #{tpu_custom_call.1} parent=0 // loop_body
    %s20 = ssub.s32 %s15, 1
    %s21 = ssub.s32 %s15, 2
    %s28 = sadd.s32 1, %s23
    %p29 = scmp.ge.s32.totalorder %s28, 2
    %s30 = scalar_select %p29, 0, %s28
    %s31 = sadd.s32 1, %s22
    %s32 = scalar_select %p29, %s31, %s22
    %p33 = scmp.ge.s32.totalorder %s32, 2
    %s34 = scalar_select %p33, 0, %s32
    %s35 = ssub.s32 %s22, %s34
    %s36 = ssub.s32 %s23, %s30
    %s37 = sor.u32 %s35, %s36
    %p38 = scmp.eq.s32.totalorder %s37, 0
    %s40 = sadd.s32 %s39, 1
    %s41 = scalar_select %p38, %s39, %s40
    %p44 = pneg %p38
    %p45 = scmp.eq.s32.totalorder %s15, 3
    %p46 = por %p44, %p45
    %p47 = scmp.ne.s32.totalorder %s39, %s42
    %p48 = scmp.eq.s32.totalorder %s15, 0
    %p49 = por %p47, %p48
    %p50 = scmp.ne.s32.totalorder %s39, %s42
    %p51 = scmp.eq.s32.totalorder %s20, 3
    %p52 = por %p50, %p51
    %p53 = scmp.ne.s32.totalorder %s42, %s43
    %p54 = scmp.eq.s32.totalorder %s20, 0
    %p55 = por %p53, %p54
    %p56 = scmp.ne.s32.totalorder %s42, %s43
    %p57 = scmp.eq.s32.totalorder %s21, 3
    %p58 = por %p56, %p57
    %p60 = scmp.ne.s32.totalorder %s43, %s59
    %p61 = scmp.eq.s32.totalorder %s21, 0
    %p62 = por %p60, %p61
    %s63 = ssub.s32 %s22, %s34
    %p64 = scmp.eq.s32.totalorder %s63, 0
    %s66 = sadd.s32 %s65, 1
    %s67 = scalar_select %p64, %s65, %s66
    %p70 = pneg %p64
    %p71 = scmp.eq.s32.totalorder %s15, 3
    %p72 = por %p70, %p71
    %p73 = scmp.ne.s32.totalorder %s65, %s68
    %p74 = scmp.eq.s32.totalorder %s15, 0
    %p75 = por %p73, %p74
    %p76 = scmp.ne.s32.totalorder %s65, %s68
    %p77 = scmp.eq.s32.totalorder %s20, 3
    %p78 = por %p76, %p77
    %p79 = scmp.ne.s32.totalorder %s68, %s69
    %p80 = scmp.eq.s32.totalorder %s20, 0
    %p81 = por %p79, %p80
    %p82 = scmp.ne.s32.totalorder %s68, %s69
    %p83 = scmp.eq.s32.totalorder %s21, 3
    %p84 = por %p82, %p83
    %p86 = scmp.ne.s32.totalorder %s69, %s85
    %p87 = scmp.eq.s32.totalorder %s21, 0
    %p88 = por %p86, %p87
    %s89 = ssub.s32 %s22, %s34
    %s90 = ssub.s32 %s23, %s30
    %s91 = sor.u32 %s89, %s90
    %p92 = scmp.eq.s32.totalorder %s91, 0
    %s94 = sadd.s32 %s93, 1
    %s95 = scalar_select %p92, %s93, %s94
    %p98 = pneg %p92
    %p99 = scmp.eq.s32.totalorder %s15, 3
    %p100 = por %p98, %p99
    %p101 = scmp.ne.s32.totalorder %s93, %s96
    %p102 = scmp.eq.s32.totalorder %s15, 0
    %p103 = por %p101, %p102
    %p104 = scmp.ne.s32.totalorder %s93, %s96
    %p105 = scmp.eq.s32.totalorder %s20, 3
    %p106 = por %p104, %p105
    %p107 = scmp.ne.s32.totalorder %s96, %s97
    %p108 = scmp.eq.s32.totalorder %s20, 0
    %p109 = por %p107, %p108
    %p110 = scmp.ne.s32.totalorder %s96, %s97
    %p111 = scmp.eq.s32.totalorder %s21, 3
    %p112 = por %p110, %p111
    %p114 = scmp.ne.s32.totalorder %s97, %s113
    %p115 = scmp.eq.s32.totalorder %s21, 0
    %p116 = por %p114, %p115
    %s117 = ssub.s32 %s22, %s34
    %p118 = scmp.eq.s32.totalorder %s117, 0
    %s120 = sadd.s32 %s119, 1
    %s121 = scalar_select %p118, %s119, %s120
    %p124 = pneg %p118
    %p125 = scmp.eq.s32.totalorder %s15, 3
    %p126 = por %p124, %p125
    %p127 = scmp.ne.s32.totalorder %s119, %s122
    %p128 = scmp.eq.s32.totalorder %s15, 0
    %p129 = por %p127, %p128
    %p130 = scmp.ne.s32.totalorder %s119, %s122
    %p131 = scmp.eq.s32.totalorder %s20, 3
    %p132 = por %p130, %p131
    %p133 = scmp.ne.s32.totalorder %s122, %s123
    %p134 = scmp.eq.s32.totalorder %s20, 0
    %p135 = por %p133, %p134
    %p136 = scmp.ne.s32.totalorder %s122, %s123
    %p137 = scmp.eq.s32.totalorder %s21, 3
    %p138 = por %p136, %p137
    %p140 = scmp.ne.s32.totalorder %s123, %s139
    %p141 = scmp.eq.s32.totalorder %s21, 0
    %p142 = por %p140, %p141
    %s144 = sadd.s32 %s143, 1
    %p147 = scmp.eq.s32.totalorder %s15, 3
    %p148 = scmp.ne.s32.totalorder %s143, %s145
    %p149 = scmp.eq.s32.totalorder %s15, 0
    %p150 = por %p148, %p149
    %p151 = scmp.ne.s32.totalorder %s143, %s145
    %p152 = scmp.eq.s32.totalorder %s20, 3
    %p153 = por %p151, %p152
    %p154 = scmp.ne.s32.totalorder %s145, %s146
    %p155 = scmp.eq.s32.totalorder %s20, 0
    %p156 = por %p154, %p155
    %p157 = scmp.ne.s32.totalorder %s145, %s146
    %p158 = scmp.eq.s32.totalorder %s21, 3
    %p159 = por %p157, %p158
    %p161 = scmp.ne.s32.totalorder %s146, %s160
    %p162 = scmp.eq.s32.totalorder %s21, 0
    %p163 = por %p161, %p162
    %s165 = sadd.s32 %s164, 1
    %p168 = scmp.eq.s32.totalorder %s15, 3
    %p169 = scmp.ne.s32.totalorder %s164, %s166
    %p170 = scmp.eq.s32.totalorder %s15, 0
    %p171 = por %p169, %p170
    %p172 = scmp.ne.s32.totalorder %s164, %s166
    %p173 = scmp.eq.s32.totalorder %s20, 3
    %p174 = por %p172, %p173
    %p175 = scmp.ne.s32.totalorder %s166, %s167
    %p176 = scmp.eq.s32.totalorder %s20, 0
    %p177 = por %p175, %p176
    %p178 = scmp.ne.s32.totalorder %s166, %s167
    %p179 = scmp.eq.s32.totalorder %s21, 3
    %p180 = por %p178, %p179
    %p182 = scmp.ne.s32.totalorder %s167, %s181
    %p183 = scmp.eq.s32.totalorder %s21, 0
    %p184 = por %p182, %p183
    %s186 = sadd.s32 %s185, 1
    %p189 = scmp.eq.s32.totalorder %s15, 3
    %p190 = scmp.ne.s32.totalorder %s185, %s187
    %p191 = scmp.eq.s32.totalorder %s15, 0
    %p192 = por %p190, %p191
    %p193 = scmp.ne.s32.totalorder %s185, %s187
    %p194 = scmp.eq.s32.totalorder %s20, 3
    %p195 = por %p193, %p194
    %p196 = scmp.ne.s32.totalorder %s187, %s188
    %p197 = scmp.eq.s32.totalorder %s20, 0
    %p198 = por %p196, %p197
    %p199 = scmp.ne.s32.totalorder %s187, %s188
    %p200 = scmp.eq.s32.totalorder %s21, 3
    %p201 = por %p199, %p200
    %p203 = scmp.ne.s32.totalorder %s188, %s202
    %p204 = scmp.eq.s32.totalorder %s21, 0
    %p205 = por %p203, %p204
    %s207 = sadd.s32 %s206, 1
    %p210 = scmp.eq.s32.totalorder %s15, 3
    %p211 = scmp.ne.s32.totalorder %s206, %s208
    %p212 = scmp.eq.s32.totalorder %s15, 0
    %p213 = por %p211, %p212
    %p214 = scmp.ne.s32.totalorder %s206, %s208
    %p215 = scmp.eq.s32.totalorder %s20, 3
    %p216 = por %p214, %p215
    %p217 = scmp.ne.s32.totalorder %s208, %s209
    %p218 = scmp.eq.s32.totalorder %s20, 0
    %p219 = por %p217, %p218
    %p220 = scmp.ne.s32.totalorder %s208, %s209
    %p221 = scmp.eq.s32.totalorder %s21, 3
    %p222 = por %p220, %p221
    %p224 = scmp.ne.s32.totalorder %s209, %s223
    %p225 = scmp.eq.s32.totalorder %s21, 0
    %p226 = por %p224, %p225
    %s228 = sadd.s32 %s227, 1
    %p231 = scmp.eq.s32.totalorder %s15, 3
    %p232 = scmp.ne.s32.totalorder %s227, %s229
    %p233 = scmp.eq.s32.totalorder %s15, 0
    %p234 = por %p232, %p233
    %p235 = scmp.ne.s32.totalorder %s227, %s229
    %p236 = scmp.eq.s32.totalorder %s20, 3
    %p237 = por %p235, %p236
    %p238 = scmp.ne.s32.totalorder %s229, %s230
    %p239 = scmp.eq.s32.totalorder %s20, 0
    %p240 = por %p238, %p239
    %p241 = scmp.ne.s32.totalorder %s229, %s230
    %p242 = scmp.eq.s32.totalorder %s21, 3
    %p243 = por %p241, %p242
    %p245 = scmp.ne.s32.totalorder %s230, %s244
    %p246 = scmp.eq.s32.totalorder %s21, 0
    %p247 = por %p245, %p246
    %s248 = ssub.s32 %s22, %s34
    %s249 = ssub.s32 %s23, %s30
    %s250 = sor.u32 %s248, %s249
    %p251 = scmp.eq.s32.totalorder %s250, 0
    %s253 = sadd.s32 %s252, 1
    %s254 = scalar_select %p251, %s252, %s253
    %p257 = pneg %p251
    %p258 = scmp.eq.s32.totalorder %s15, 3
    %p259 = por %p257, %p258
    %p260 = scmp.ne.s32.totalorder %s252, %s255
    %p261 = scmp.eq.s32.totalorder %s15, 0
    %p262 = por %p260, %p261
    %p263 = scmp.ne.s32.totalorder %s252, %s255
    %p264 = scmp.eq.s32.totalorder %s20, 3
    %p265 = por %p263, %p264
    %p266 = scmp.ne.s32.totalorder %s255, %s256
    %p267 = scmp.eq.s32.totalorder %s20, 0
    %p268 = por %p266, %p267
    %p269 = scmp.ne.s32.totalorder %s255, %s256
    %p270 = scmp.eq.s32.totalorder %s21, 3
    %p271 = por %p269, %p270
    %p273 = scmp.ne.s32.totalorder %s256, %s272
    %p274 = scmp.eq.s32.totalorder %s21, 0
    %p275 = por %p273, %p274
    %p276 = scmp.le.s32.totalorder 1, %s15
    %p277 = scmp.lt.s32.totalorder %s15, 5
    %p278 = pnand %p276, %p277
    %p279 = pneg %p278
    // Predicated region
    $region9: #{tpu_custom_call.1} parent=5 // pred_check
      _
    $region10: #{tpu_custom_call.1} parent=5 // pred_check_branch
      %281 = sbr.rel (%p278) target = $region12
    $region11: #{tpu_custom_call.1} parent=5 // pred_region
      %s282 = ssub.s32 %s15, 1
      // Predicated region
      $region13: #{tpu_custom_call.1} parent=11 // pred_check
        %p283 = pneg %p156
      $region14: #{tpu_custom_call.1} parent=11 // pred_check_branch
        %285 = sbr.rel (%p283) target = $region16
      $region15: #{tpu_custom_call.1} parent=11 // pred_region
        _
      $region16: #{tpu_custom_call.1} parent=11 // pred_fallthru
        _
      // Predicated region
      $region17: #{tpu_custom_call.1} parent=11 // pred_check
        %p286 = pneg %p177
      $region18: #{tpu_custom_call.1} parent=11 // pred_check_branch
        %288 = sbr.rel (%p286) target = $region20
      $region19: #{tpu_custom_call.1} parent=11 // pred_region
        _
      $region20: #{tpu_custom_call.1} parent=11 // pred_fallthru
        _
      // Predicated region
      $region21: #{tpu_custom_call.1} parent=11 // pred_check
        %p289 = pneg %p198
      $region22: #{tpu_custom_call.1} parent=11 // pred_check_branch
        %291 = sbr.rel (%p289) target = $region24
      $region23: #{tpu_custom_call.1} parent=11 // pred_region
        _
      $region24: #{tpu_custom_call.1} parent=11 // pred_fallthru
        _
      // Predicated region
      $region25: #{tpu_custom_call.1} parent=11 // pred_check
        %p292 = pneg %p219
      $region26: #{tpu_custom_call.1} parent=11 // pred_check_branch
        %294 = sbr.rel (%p292) target = $region28
      $region27: #{tpu_custom_call.1} parent=11 // pred_region
        _
      $region28: #{tpu_custom_call.1} parent=11 // pred_fallthru
        _
      // Predicated region
      $region29: #{tpu_custom_call.1} parent=11 // pred_check
        %p295 = pneg %p240
      $region30: #{tpu_custom_call.1} parent=11 // pred_check_branch
        %297 = sbr.rel (%p295) target = $region32
      $region31: #{tpu_custom_call.1} parent=11 // pred_region
        _
      $region32: #{tpu_custom_call.1} parent=11 // pred_fallthru
        _
    $region12: #{tpu_custom_call.1} parent=5 // pred_fallthru
      _
    %p298 = scmp.lt.s32.totalorder %s15, 4
    // Predicated region
    $region33: #{tpu_custom_call.1} parent=5 // pred_check
      %p299 = pneg %p298
    $region34: #{tpu_custom_call.1} parent=5 // pred_check_branch
      %301 = sbr.rel (%p299) target = $region36
    $region35: #{tpu_custom_call.1} parent=5 // pred_region
      // Predicated region
      $region37: #{tpu_custom_call.1} parent=35 // pred_check
        %p302 = pneg %p49
      $region38: #{tpu_custom_call.1} parent=35 // pred_check_branch
        %304 = sbr.rel (%p302) target = $region40
      $region39: #{tpu_custom_call.1} parent=35 // pred_region
        %s305 = smul.u32 4, %s23
        %p306 = scmp.lt.s32.totalorder %s22, 1
        %s307 = scalar_select %p306, %s22, 1
        %p308 = scmp.lt.s32.totalorder %s305, 7
        %s309 = scalar_select %p308, %s305, 7
        %s310 = smul.addr %s307, 8
        %s311 = sadd.s32 %s309, %s310
        %s312 = smul.addr %s311, 8
        %s313 = scalar_lea.vmem %s0, %s312
        %s314 = smul.u32 4, %s23
      $region40: #{tpu_custom_call.1} parent=35 // pred_fallthru
        _
      // Predicated region
      $region41: #{tpu_custom_call.1} parent=35 // pred_check
        %p315 = pneg %p75
      $region42: #{tpu_custom_call.1} parent=35 // pred_check_branch
        %317 = sbr.rel (%p315) target = $region44
      $region43: #{tpu_custom_call.1} parent=35 // pred_region
        %p318 = scmp.lt.s32.totalorder %s22, 1
        %s319 = scalar_select %p318, %s22, 1
        %s320 = smul.addr %s319, 4
        %s321 = scalar_lea.vmem %s1, %s320
      $region44: #{tpu_custom_call.1} parent=35 // pred_fallthru
        _
      // Predicated region
      $region45: #{tpu_custom_call.1} parent=35 // pred_check
        %p322 = pneg %p103
      $region46: #{tpu_custom_call.1} parent=35 // pred_check_branch
        %324 = sbr.rel (%p322) target = $region48
      $region47: #{tpu_custom_call.1} parent=35 // pred_region
        %s325 = smul.u32 4, %s23
        %p326 = scmp.lt.s32.totalorder %s22, 1
        %s327 = scalar_select %p326, %s22, 1
        %p328 = scmp.lt.s32.totalorder %s325, 7
        %s329 = scalar_select %p328, %s325, 7
        %s330 = smul.addr %s327, 8
        %s331 = sadd.s32 %s329, %s330
        %s332 = smul.addr %s331, 8
        %s333 = scalar_lea.vmem %s2, %s332
        %s334 = smul.u32 4, %s23
      $region48: #{tpu_custom_call.1} parent=35 // pred_fallthru
        _
      // Predicated region
      $region49: #{tpu_custom_call.1} parent=35 // pred_check
        %p335 = pneg %p129
      $region50: #{tpu_custom_call.1} parent=35 // pred_check_branch
        %337 = sbr.rel (%p335) target = $region52
      $region51: #{tpu_custom_call.1} parent=35 // pred_region
        %p338 = scmp.lt.s32.totalorder %s22, 1
        %s339 = scalar_select %p338, %s22, 1
        %s340 = smul.addr %s339, 2
        %s341 = smul.addr %s340, 8
        %s342 = scalar_lea.vmem %s3, %s341
      $region52: #{tpu_custom_call.1} parent=35 // pred_fallthru
        _
    $region36: #{tpu_custom_call.1} parent=5 // pred_fallthru
      _
    %p343 = scmp.le.s32.totalorder 1, %s15
    %p344 = scmp.lt.s32.totalorder %s15, 5
    %p345 = pnand %p343, %p344
    %p346 = pneg %p345
    // Predicated region
    $region53: #{tpu_custom_call.1} parent=5 // pred_check
      _
    $region54: #{tpu_custom_call.1} parent=5 // pred_check_branch
      %348 = sbr.rel (%p345) target = $region56
    $region55: #{tpu_custom_call.1} parent=5 // pred_region
      %s349 = ssub.s32 %s15, 1
      %s350 = smul.u32 4, %s25
      %p351 = scmp.lt.s32.totalorder %s24, 1
      %s352 = scalar_select %p351, %s24, 1
      %p353 = scmp.lt.s32.totalorder %s350, 7
      %s354 = scalar_select %p353, %s350, 7
      %s355 = smul.addr %s352, 8
      %s356 = sadd.s32 %s354, %s355
      %s357 = smul.addr %s356, 8
      %s358 = scalar_lea.vmem %s0, %s357
      %p359 = pneg %p55
      %p360 = pneg %p52
      %p361 = scmp.lt.s32.totalorder %s24, 1
      %s362 = scalar_select %p361, %s24, 1
      %s363 = smul.addr %s362, 4
      %s364 = scalar_lea.vmem %s1, %s363
      %p365 = pneg %p81
      %p366 = pneg %p78
      %s367 = smul.u32 4, %s25
      %p368 = scmp.lt.s32.totalorder %s24, 1
      %s369 = scalar_select %p368, %s24, 1
      %p370 = scmp.lt.s32.totalorder %s367, 7
      %s371 = scalar_select %p370, %s367, 7
      %s372 = smul.addr %s369, 8
      %s373 = sadd.s32 %s371, %s372
      %s374 = smul.addr %s373, 8
      %s375 = scalar_lea.vmem %s2, %s374
      %p376 = pneg %p109
      %p377 = pneg %p106
      %p378 = scmp.lt.s32.totalorder %s24, 1
      %s379 = scalar_select %p378, %s24, 1
      %s380 = smul.addr %s379, 2
      %s381 = smul.addr %s380, 8
      %s382 = scalar_lea.vmem %s3, %s381
      %p383 = pneg %p135
      %p384 = pneg %p132
      %p385 = pneg %p156
      %p386 = pneg %p153
      %p387 = pneg %p177
      %p388 = pneg %p174
      %p389 = pneg %p198
      %p390 = pneg %p195
      %p391 = pneg %p219
      %p392 = pneg %p216
      %p393 = pneg %p240
      %p394 = pneg %p237
      %p395 = pneg %p268
      %p396 = pneg %p265
      %s397 = smul.u32 4, %s25
      %p398 = scmp.lt.s32.totalorder %s24, 1
      %s399 = scalar_select %p398, %s24, 1
      %p400 = scmp.lt.s32.totalorder %s397, 7
      %s401 = scalar_select %p400, %s397, 7
      %s402 = smul.addr %s399, 8
      %s403 = sadd.s32 %s401, %s402
      %s404 = smul.addr %s403, 8
      %s405 = scalar_lea.vmem %s9, %s404
      %s406 = smul.u32 4, %s25
      %p407 = scmp.lt.s32.totalorder %s24, 1
      %s408 = scalar_select %p407, %s24, 1
      %p409 = scmp.lt.s32.totalorder %s406, 7
      %s410 = scalar_select %p409, %s406, 7
      %s411 = smul.addr %s408, 8
      %s412 = sadd.s32 %s410, %s411
      %s413 = smul.addr %s412, 8
      %s414 = scalar_lea.vmem %s0, %s413
      %s415 = smul.u32 4, %s25
      %p416 = scmp.lt.s32.totalorder %s24, 1
      %s417 = scalar_select %p416, %s24, 1
      %s418 = smul.addr %s417, 4
      %s419 = scalar_lea.vmem %s1, %s418
      %s420 = smul.u32 4, %s25
      %p421 = scmp.lt.s32.totalorder %s24, 1
      %s422 = scalar_select %p421, %s24, 1
      %p423 = scmp.lt.s32.totalorder %s420, 7
      %s424 = scalar_select %p423, %s420, 7
      %s425 = smul.addr %s422, 8
      %s426 = sadd.s32 %s424, %s425
      %s427 = smul.addr %s426, 8
      %s428 = scalar_lea.vmem %s2, %s427
      %s429 = smul.u32 4, %s25
      %p430 = scmp.lt.s32.totalorder %s24, 1
      %s431 = scalar_select %p430, %s24, 1
      %s432 = smul.addr %s431, 2
      %s433 = smul.addr %s432, 8
      %s434 = scalar_lea.vmem %s3, %s433
      %s435 = smul.u32 4, %s25
      %p436 = scmp.lt.s32.totalorder %s24, 1
      %s437 = scalar_select %p436, %s24, 1
      %p438 = scmp.lt.s32.totalorder %s435, 7
      %s439 = scalar_select %p438, %s435, 7
      %s440 = smul.addr %s437, 8
      %s441 = sadd.s32 %s439, %s440
      %s442 = smul.addr %s441, 8
      %s443 = scalar_lea.vmem %s9, %s442
      %s444 = smul.u32 4, %s25
      %v445 = vld [vmem:[%s414] sm:$0xff]
      %v446 = vld [vmem:[%s414 + $0x8] sm:$0xff]
      %v447 = vld [vmem:[%s414 + $0x10] sm:$0xff]
      %v448 = vld [vmem:[%s414 + $0x18] sm:$0xff]
      %v449 = vld [vmem:[%s419] sm:$0x7]
      %v450 = vld [vmem:[%s428] sm:$0xff]
      %v451 = vld [vmem:[%s428 + $0x8] sm:$0xff]
      %v452 = vld [vmem:[%s428 + $0x10] sm:$0xff]
      %v453 = vld [vmem:[%s428 + $0x18] sm:$0xff]
      %v454 = vld [vmem:[%s434] sm:$0xff]
      %v455 = vld [vmem:[%s434 + $0x8] sm:$0xff]
      %v456 = vmul.f32 %v445, %v445
      %v457 = vmul.f32 %v446, %v446
      %v458 = vmul.f32 %v447, %v447
      %v459 = vmul.f32 %v448, %v448
      %vm460 = vcmask 23552
      %v461 = vsel %vm460, %v456, 0.0
      %462 = vadd.xlane.f32.xlu0 %v461
      %v463 = vpop.xlane.xlu0 %462
      %v464 = vsel %vm460, %v457, 0.0
      %465 = vadd.xlane.f32.xlu0 %v464
      %v466 = vpop.xlane.xlu0 %465
      %v467 = vsel %vm460, %v458, 0.0
      %468 = vadd.xlane.f32.xlu0 %v467
      %v469 = vpop.xlane.xlu0 %468
      %v470 = vsel %vm460, %v459, 0.0
      %471 = vadd.xlane.f32.xlu0 %v470
      %v472 = vpop.xlane.xlu0 %471
      %v473 = vmul.f32 %v449, %v449
      %vm474 = vcmask 124928
      %v475 = vsel %vm474, %v473, 0.0
      %v476 = vrot.slane %v475, 4
      %v477 = vadd.f32 %v475, %v476
      %v478 = vrot.slane %v477, 2
      %v479 = vadd.f32 %v477, %v478
      %v480 = vrot.slane %v479, 1
      %v481 = vadd.f32 %v479, %v480
      %v483 = vsel %vm460, %v445, 0
      %v486 = vsel %vm460, %v446, 0
      %v489 = vsel %vm460, %v447, 0
      %v492 = vsel %vm460, %v448, 0
      %vm494 = vcmask 1042432
      %v496 = vsel %vm494, %v449, 0
      %498 = vmatprep.subr.mxu0 0.0
      %499 = vmatpush1.msra.mxu0 %v496
      %500 = vmatprep.subr.mxu0 0.0
      %501 = vmatpush1.msra.mxu0 0.0
      %502 = vmatprep.subr.mxu0 0.0
      %503 = vmatpush1.msra.mxu0 0.0
      %504 = vmatprep.subr.mxu0 0.0
      %505 = vmatpush1.msra.mxu0 0.0
      %506 = vmatprep.subr.mxu0 0.0
      %507 = vmatpush1.msra.mxu0 0.0
      %508 = vmatprep.subr.mxu0 0.0
      %509 = vmatpush1.msra.mxu0 0.0
      %510 = vmatprep.subr.mxu0 0.0
      %511 = vmatpush1.msra.mxu0 0.0
      %512 = vmatprep.subr.mxu0 0.0
      %513 = vmatpush1.msra.mxu0 0.0
      %514 = vmatprep.subr.mxu0 0.0
      %515 = vmatpush1.msra.mxu0 0.0
      %516 = vmatprep.subr.mxu0 0.0
      %517 = vmatpush1.msra.mxu0 0.0
      %518 = vmatprep.subr.mxu0 0.0
      %519 = vmatpush1.msra.mxu0 0.0
      %520 = vmatprep.subr.mxu0 0.0
      %521 = vmatpush1.msra.mxu0 0.0
      %522 = vmatprep.subr.mxu0 0.0
      %523 = vmatpush1.msra.mxu0 0.0
      %524 = vmatprep.subr.mxu0 0.0
      %525 = vmatpush1.msra.mxu0 0.0
      %526 = vmatprep.subr.mxu0 0.0
      %527 = vmatpush1.msra.mxu0 0.0
      %528 = vmatprep.subr.mxu0 0.0
      %529 = vmatpush1.msra.mxu0 0.0
      %530 = vmatprep.subr.mxu0 0.0
      %531 = vmatpush1.msra.mxu0 0.0
      %532 = vmatprep.subr.mxu0 0.0
      %533 = vmatpush1.msra.mxu0 0.0
      %534 = vmatprep.subr.mxu0 0.0
      %535 = vmatpush1.msra.mxu0 0.0
      %536 = vmatprep.subr.mxu0 0.0
      %537 = vmatpush1.msra.mxu0 0.0
      %538 = vmatprep.subr.mxu0 0.0
      %539 = vmatpush1.msra.mxu0 0.0
      %540 = vmatprep.subr.mxu0 0.0
      %541 = vmatpush1.msra.mxu0 0.0
      %542 = vmatprep.subr.mxu0 0.0
      %543 = vmatpush1.msra.mxu0 0.0
      %544 = vmatprep.subr.mxu0 0.0
      %545 = vmatpush1.msra.mxu0 0.0
      %546 = vmatprep.subr.mxu0 0.0
      %547 = vmatpush1.msra.mxu0 0.0
      %548 = vmatprep.subr.mxu0 0.0
      %549 = vmatpush1.msra.mxu0 0.0
      %550 = vmatprep.subr.mxu0 0.0
      %551 = vmatpush1.msra.mxu0 0.0
      %552 = vmatprep.subr.mxu0 0.0
      %553 = vmatpush1.msra.mxu0 0.0
      %554 = vmatprep.subr.mxu0 0.0
      %555 = vmatpush1.msra.mxu0 0.0
      %556 = vmatprep.subr.mxu0 0.0
      %557 = vmatpush1.msra.mxu0 0.0
      %558 = vmatprep.subr.mxu0 0.0
      %559 = vmatpush1.msra.mxu0 0.0
      %560 = vmatprep.subr.mxu0 0.0
      %561 = vmatpush1.msra.mxu0 0.0
      %562 = vmatprep.mubr.f32.mxu0 0.0
      %563 = vmatmul.mubr.f32.gmra.mrb[0].mxu0 %v483
      %v564 = vpop.f32.mrb[0].mxu0
      %v565 = vadd.f32 0.0, %v564
      %v566 = vpop.f32.mrb[0].mxu0
      %567 = vmatprep.mubr.f32.mxu0 0.0
      %568 = vmatmul.mubr.f32.gmra.mrb[0].mxu0 %v486
      %v569 = vpop.f32.mrb[0].mxu0
      %v570 = vadd.f32 0.0, %v569
      %v571 = vpop.f32.mrb[0].mxu0
      %572 = vmatprep.mubr.f32.mxu0 0.0
      %573 = vmatmul.mubr.f32.gmra.mrb[0].mxu0 %v489
      %v574 = vpop.f32.mrb[0].mxu0
      %v575 = vadd.f32 0.0, %v574
      %v576 = vpop.f32.mrb[0].mxu0
      %577 = vmatprep.mubr.f32.mxu0 0.0
      %578 = vmatmul.mubr.f32.gmra.mrb[0].mxu0 %v492
      %v579 = vpop.f32.mrb[0].mxu0
      %v580 = vadd.f32 0.0, %v579
      %v581 = vpop.f32.mrb[0].mxu0
      %582 = vdwg.mxu0
      %v583 = vadd.f32 %v463, %v481
      %v584 = vadd.f32 %v466, %v481
      %v585 = vadd.f32 %v469, %v481
      %v586 = vadd.f32 %v472, %v481
      %v587 = vmul.f32 %v565, 2.0
      %v588 = vmul.f32 %v570, 2.0
      %v589 = vmul.f32 %v575, 2.0
      %v590 = vmul.f32 %v580, 2.0
      %v591 = vsub.f32 %v583, %v587
      %v592 = vsub.f32 %v584, %v588
      %v593 = vsub.f32 %v585, %v589
      %v594 = vsub.f32 %v586, %v590
      %v595 = vmax.f32 %v591, 0.0
      %v596 = vmax.f32 %v592, 0.0
      %v597 = vmax.f32 %v593, 0.0
      %v598 = vmax.f32 %v594, 0.0
      %v599 = vlaneseq
      %v600 = vand.u32 %v599, 127
      %vm601 = vcmask 130048
      %v602 = vsel %vm601, %v595, inf
      %603 = vmin.xlane.f32.xlu0 %v602
      %v604 = vpop.xlane.xlu0 %603
      %v605 = vsel %vm601, %v596, inf
      %606 = vmin.xlane.f32.xlu0 %v605
      %v607 = vpop.xlane.xlu0 %606
      %v608 = vsel %vm601, %v597, inf
      %609 = vmin.xlane.f32.xlu0 %v608
      %v610 = vpop.xlane.xlu0 %609
      %v611 = vsel %vm601, %v598, inf
      %612 = vmin.xlane.f32.xlu0 %v611
      %v613 = vpop.xlane.xlu0 %612
      %vm614 = vcmp.eq.f32.partialorder %v595, %v604
      %vm615 = vcmp.eq.f32.partialorder %v596, %v607
      %vm616 = vcmp.eq.f32.partialorder %v597, %v610
      %vm617 = vcmp.eq.f32.partialorder %v598, %v613
      %v618 = vsel %vm614, %v600, 16
      %v619 = vsel %vm615, %v600, 16
      %v620 = vsel %vm616, %v600, 16
      %v621 = vsel %vm617, %v600, 16
      %v622 = vsel %vm601, %v618, 2147483647
      %v623 = vand.u32 %v622, 65535
      %v624 = vshra.s32 %v622, 16
      %v625 = vcvt.s32.f32 %v623
      %v626 = vcvt.s32.f32 %v624
      %627 = vmin.xlane.f32.xlu0 %v626
      %v628 = vpop.xlane.xlu0 %627
      %vm629 = vcmp.eq.f32.partialorder %v626, %v628
      %v630 = vsel %vm629, %v625, inf
      %631 = vmin.xlane.f32.xlu0 %v630
      %v632 = vpop.xlane.xlu0 %631
      %v633 = vcvt.f32.s32 %v632
      %v634 = vcvt.f32.s32 %v628
      %v635 = vshll.u32 %v634, 16
      %v636 = vadd.s32 %v635, %v633
      %v637 = vsel %vm601, %v619, 2147483647
      %v638 = vand.u32 %v637, 65535
      %v639 = vshra.s32 %v637, 16
      %v640 = vcvt.s32.f32 %v638
      %v641 = vcvt.s32.f32 %v639
      %642 = vmin.xlane.f32.xlu0 %v641
      %v643 = vpop.xlane.xlu0 %642
      %vm644 = vcmp.eq.f32.partialorder %v641, %v643
      %v645 = vsel %vm644, %v640, inf
      %646 = vmin.xlane.f32.xlu0 %v645
      %v647 = vpop.xlane.xlu0 %646
      %v648 = vcvt.f32.s32 %v647
      %v649 = vcvt.f32.s32 %v643
      %v650 = vshll.u32 %v649, 16
      %v651 = vadd.s32 %v650, %v648
      %v652 = vsel %vm601, %v620, 2147483647
      %v653 = vand.u32 %v652, 65535
      %v654 = vshra.s32 %v652, 16
      %v655 = vcvt.s32.f32 %v653
      %v656 = vcvt.s32.f32 %v654
      %657 = vmin.xlane.f32.xlu0 %v656
      %v658 = vpop.xlane.xlu0 %657
      %vm659 = vcmp.eq.f32.partialorder %v656, %v658
      %v660 = vsel %vm659, %v655, inf
      %661 = vmin.xlane.f32.xlu0 %v660
      %v662 = vpop.xlane.xlu0 %661
      %v663 = vcvt.f32.s32 %v662
      %v664 = vcvt.f32.s32 %v658
      %v665 = vshll.u32 %v664, 16
      %v666 = vadd.s32 %v665, %v663
      %v667 = vsel %vm601, %v621, 2147483647
      %v668 = vand.u32 %v667, 65535
      %v669 = vshra.s32 %v667, 16
      %v670 = vcvt.s32.f32 %v668
      %v671 = vcvt.s32.f32 %v669
      %672 = vmin.xlane.f32.xlu0 %v671
      %v673 = vpop.xlane.xlu0 %672
      %vm674 = vcmp.eq.f32.partialorder %v671, %v673
      %v675 = vsel %vm674, %v670, inf
      %676 = vmin.xlane.f32.xlu0 %v675
      %v677 = vpop.xlane.xlu0 %676
      %v678 = vcvt.f32.s32 %v677
      %v679 = vcvt.f32.s32 %v673
      %v680 = vshll.u32 %v679, 16
      %v681 = vadd.s32 %v680, %v678
      %vm682 = vcmp.eq.s32.totalorder %v600, %v636
      %vm683 = vcmp.eq.s32.totalorder %v600, %v651
      %vm684 = vcmp.eq.s32.totalorder %v600, %v666
      %vm685 = vcmp.eq.s32.totalorder %v600, %v681
      %v686 = vadd.f32 %v604, 1e-08
      %v687 = vadd.f32 %v607, 1e-08
      %v688 = vadd.f32 %v610, 1e-08
      %v689 = vadd.f32 %v613, 1e-08
      %v690 = vrcp.pop %v686
      %v691 = vmul.f32 1.0, %v690
      %v692 = vrcp.pop %v687
      %v693 = vmul.f32 1.0, %v692
      %v694 = vrcp.pop %v688
      %v695 = vmul.f32 1.0, %v694
      %v696 = vrcp.pop %v689
      %v697 = vmul.f32 1.0, %v696
      %v698 = vsel %vm682, %v691, 0.0
      %v699 = vsel %vm683, %v693, 0.0
      %v700 = vsel %vm684, %v695, 0.0
      %v701 = vsel %vm685, %v697, 0.0
      %v702 = vadd.f32 %v698, 0.0
      %v703 = vadd.f32 %v699, 0.0
      %v704 = vadd.f32 %v700, 0.0
      %v705 = vadd.f32 %v701, 0.0
      %v706 = vadd.f32 %v691, 0.0
      %v707 = vadd.f32 %v693, 0.0
      %v708 = vadd.f32 %v695, 0.0
      %v709 = vadd.f32 %v697, 0.0
      %v710 = vsel %vm682, inf, %v595
      %v711 = vsel %vm683, inf, %v596
      %v712 = vsel %vm684, inf, %v597
      %v713 = vsel %vm685, inf, %v598
      %v714 = vsel %vm601, %v710, inf
      %715 = vmin.xlane.f32.xlu0 %v714
      %v716 = vpop.xlane.xlu0 %715
      %v717 = vsel %vm601, %v711, inf
      %718 = vmin.xlane.f32.xlu0 %v717
      %v719 = vpop.xlane.xlu0 %718
      %v720 = vsel %vm601, %v712, inf
      %721 = vmin.xlane.f32.xlu0 %v720
      %v722 = vpop.xlane.xlu0 %721
      %v723 = vsel %vm601, %v713, inf
      %724 = vmin.xlane.f32.xlu0 %v723
      %v725 = vpop.xlane.xlu0 %724
      %vm726 = vcmp.eq.f32.partialorder %v710, %v716
      %vm727 = vcmp.eq.f32.partialorder %v711, %v719
      %vm728 = vcmp.eq.f32.partialorder %v712, %v722
      %vm729 = vcmp.eq.f32.partialorder %v713, %v725
      %v730 = vsel %vm726, %v600, 16
      %v731 = vsel %vm727, %v600, 16
      %v732 = vsel %vm728, %v600, 16
      %v733 = vsel %vm729, %v600, 16
      %v734 = vsel %vm601, %v730, 2147483647
      %v735 = vand.u32 %v734, 65535
      %v736 = vshra.s32 %v734, 16
      %v737 = vcvt.s32.f32 %v735
      %v738 = vcvt.s32.f32 %v736
      %739 = vmin.xlane.f32.xlu0 %v738
      %v740 = vpop.xlane.xlu0 %739
      %vm741 = vcmp.eq.f32.partialorder %v738, %v740
      %v742 = vsel %vm741, %v737, inf
      %743 = vmin.xlane.f32.xlu0 %v742
      %v744 = vpop.xlane.xlu0 %743
      %v745 = vcvt.f32.s32 %v744
      %v746 = vcvt.f32.s32 %v740
      %v747 = vshll.u32 %v746, 16
      %v748 = vadd.s32 %v747, %v745
      %v749 = vsel %vm601, %v731, 2147483647
      %v750 = vand.u32 %v749, 65535
      %v751 = vshra.s32 %v749, 16
      %v752 = vcvt.s32.f32 %v750
      %v753 = vcvt.s32.f32 %v751
      %754 = vmin.xlane.f32.xlu0 %v753
      %v755 = vpop.xlane.xlu0 %754
      %vm756 = vcmp.eq.f32.partialorder %v753, %v755
      %v757 = vsel %vm756, %v752, inf
      %758 = vmin.xlane.f32.xlu0 %v757
      %v759 = vpop.xlane.xlu0 %758
      %v760 = vcvt.f32.s32 %v759
      %v761 = vcvt.f32.s32 %v755
      %v762 = vshll.u32 %v761, 16
      %v763 = vadd.s32 %v762, %v760
      %v764 = vsel %vm601, %v732, 2147483647
      %v765 = vand.u32 %v764, 65535
      %v766 = vshra.s32 %v764, 16
      %v767 = vcvt.s32.f32 %v765
      %v768 = vcvt.s32.f32 %v766
      %769 = vmin.xlane.f32.xlu0 %v768
      %v770 = vpop.xlane.xlu0 %769
      %vm771 = vcmp.eq.f32.partialorder %v768, %v770
      %v772 = vsel %vm771, %v767, inf
      %773 = vmin.xlane.f32.xlu0 %v772
      %v774 = vpop.xlane.xlu0 %773
      %v775 = vcvt.f32.s32 %v774
      %v776 = vcvt.f32.s32 %v770
      %v777 = vshll.u32 %v776, 16
      %v778 = vadd.s32 %v777, %v775
      %v779 = vsel %vm601, %v733, 2147483647
      %v780 = vand.u32 %v779, 65535
      %v781 = vshra.s32 %v779, 16
      %v782 = vcvt.s32.f32 %v780
      %v783 = vcvt.s32.f32 %v781
      %784 = vmin.xlane.f32.xlu0 %v783
      %v785 = vpop.xlane.xlu0 %784
      %vm786 = vcmp.eq.f32.partialorder %v783, %v785
      %v787 = vsel %vm786, %v782, inf
      %788 = vmin.xlane.f32.xlu0 %v787
      %v789 = vpop.xlane.xlu0 %788
      %v790 = vcvt.f32.s32 %v789
      %v791 = vcvt.f32.s32 %v785
      %v792 = vshll.u32 %v791, 16
      %v793 = vadd.s32 %v792, %v790
      %vm794 = vcmp.eq.s32.totalorder %v600, %v748
      %vm795 = vcmp.eq.s32.totalorder %v600, %v763
      %vm796 = vcmp.eq.s32.totalorder %v600, %v778
      %vm797 = vcmp.eq.s32.totalorder %v600, %v793
      %v798 = vadd.f32 %v716, 1e-08
      %v799 = vadd.f32 %v719, 1e-08
      %v800 = vadd.f32 %v722, 1e-08
      %v801 = vadd.f32 %v725, 1e-08
      %v802 = vrcp.pop %v798
      %v803 = vmul.f32 1.0, %v802
      %v804 = vrcp.pop %v799
      %v805 = vmul.f32 1.0, %v804
      %v806 = vrcp.pop %v800
      %v807 = vmul.f32 1.0, %v806
      %v808 = vrcp.pop %v801
      %v809 = vmul.f32 1.0, %v808
      %v810 = vsel %vm794, %v803, 0.0
      %v811 = vsel %vm795, %v805, 0.0
      %v812 = vsel %vm796, %v807, 0.0
      %v813 = vsel %vm797, %v809, 0.0
      %v814 = vadd.f32 %v702, %v810
      %v815 = vadd.f32 %v703, %v811
      %v816 = vadd.f32 %v704, %v812
      %v817 = vadd.f32 %v705, %v813
      %v818 = vadd.f32 %v706, %v803
      %v819 = vadd.f32 %v707, %v805
      %v820 = vadd.f32 %v708, %v807
      %v821 = vadd.f32 %v709, %v809
      %v822 = vsel %vm794, inf, %v710
      %v823 = vsel %vm795, inf, %v711
      %v824 = vsel %vm796, inf, %v712
      %v825 = vsel %vm797, inf, %v713
      %v826 = vsel %vm601, %v822, inf
      %827 = vmin.xlane.f32.xlu0 %v826
      %v828 = vpop.xlane.xlu0 %827
      %v829 = vsel %vm601, %v823, inf
      %830 = vmin.xlane.f32.xlu0 %v829
      %v831 = vpop.xlane.xlu0 %830
      %v832 = vsel %vm601, %v824, inf
      %833 = vmin.xlane.f32.xlu0 %v832
      %v834 = vpop.xlane.xlu0 %833
      %v835 = vsel %vm601, %v825, inf
      %836 = vmin.xlane.f32.xlu0 %v835
      %v837 = vpop.xlane.xlu0 %836
      %vm838 = vcmp.eq.f32.partialorder %v822, %v828
      %vm839 = vcmp.eq.f32.partialorder %v823, %v831
      %vm840 = vcmp.eq.f32.partialorder %v824, %v834
      %vm841 = vcmp.eq.f32.partialorder %v825, %v837
      %v842 = vsel %vm838, %v600, 16
      %v843 = vsel %vm839, %v600, 16
      %v844 = vsel %vm840, %v600, 16
      %v845 = vsel %vm841, %v600, 16
      %v846 = vsel %vm601, %v842, 2147483647
      %v847 = vand.u32 %v846, 65535
      %v848 = vshra.s32 %v846, 16
      %v849 = vcvt.s32.f32 %v847
      %v850 = vcvt.s32.f32 %v848
      %851 = vmin.xlane.f32.xlu0 %v850
      %v852 = vpop.xlane.xlu0 %851
      %vm853 = vcmp.eq.f32.partialorder %v850, %v852
      %v854 = vsel %vm853, %v849, inf
      %855 = vmin.xlane.f32.xlu0 %v854
      %v856 = vpop.xlane.xlu0 %855
      %v857 = vcvt.f32.s32 %v856
      %v858 = vcvt.f32.s32 %v852
      %v859 = vshll.u32 %v858, 16
      %v860 = vadd.s32 %v859, %v857
      %v861 = vsel %vm601, %v843, 2147483647
      %v862 = vand.u32 %v861, 65535
      %v863 = vshra.s32 %v861, 16
      %v864 = vcvt.s32.f32 %v862
      %v865 = vcvt.s32.f32 %v863
      %866 = vmin.xlane.f32.xlu0 %v865
      %v867 = vpop.xlane.xlu0 %866
      %vm868 = vcmp.eq.f32.partialorder %v865, %v867
      %v869 = vsel %vm868, %v864, inf
      %870 = vmin.xlane.f32.xlu0 %v869
      %v871 = vpop.xlane.xlu0 %870
      %v872 = vcvt.f32.s32 %v871
      %v873 = vcvt.f32.s32 %v867
      %v874 = vshll.u32 %v873, 16
      %v875 = vadd.s32 %v874, %v872
      %v876 = vsel %vm601, %v844, 2147483647
      %v877 = vand.u32 %v876, 65535
      %v878 = vshra.s32 %v876, 16
      %v879 = vcvt.s32.f32 %v877
      %v880 = vcvt.s32.f32 %v878
      %881 = vmin.xlane.f32.xlu0 %v880
      %v882 = vpop.xlane.xlu0 %881
      %vm883 = vcmp.eq.f32.partialorder %v880, %v882
      %v884 = vsel %vm883, %v879, inf
      %885 = vmin.xlane.f32.xlu0 %v884
      %v886 = vpop.xlane.xlu0 %885
      %v887 = vcvt.f32.s32 %v886
      %v888 = vcvt.f32.s32 %v882
      %v889 = vshll.u32 %v888, 16
      %v890 = vadd.s32 %v889, %v887
      %v891 = vsel %vm601, %v845, 2147483647
      %v892 = vand.u32 %v891, 65535
      %v893 = vshra.s32 %v891, 16
      %v894 = vcvt.s32.f32 %v892
      %v895 = vcvt.s32.f32 %v893
      %896 = vmin.xlane.f32.xlu0 %v895
      %v897 = vpop.xlane.xlu0 %896
      %vm898 = vcmp.eq.f32.partialorder %v895, %v897
      %v899 = vsel %vm898, %v894, inf
      %900 = vmin.xlane.f32.xlu0 %v899
      %v901 = vpop.xlane.xlu0 %900
      %v902 = vcvt.f32.s32 %v901
      %v903 = vcvt.f32.s32 %v897
      %v904 = vshll.u32 %v903, 16
      %v905 = vadd.s32 %v904, %v902
      %vm906 = vcmp.eq.s32.totalorder %v600, %v860
      %vm907 = vcmp.eq.s32.totalorder %v600, %v875
      %vm908 = vcmp.eq.s32.totalorder %v600, %v890
      %vm909 = vcmp.eq.s32.totalorder %v600, %v905
      %v910 = vadd.f32 %v828, 1e-08
      %v911 = vadd.f32 %v831, 1e-08
      %v912 = vadd.f32 %v834, 1e-08
      %v913 = vadd.f32 %v837, 1e-08
      %v914 = vrcp.pop %v910
      %v915 = vmul.f32 1.0, %v914
      %v916 = vrcp.pop %v911
      %v917 = vmul.f32 1.0, %v916
      %v918 = vrcp.pop %v912
      %v919 = vmul.f32 1.0, %v918
      %v920 = vrcp.pop %v913
      %v921 = vmul.f32 1.0, %v920
      %v922 = vsel %vm906, %v915, 0.0
      %v923 = vsel %vm907, %v917, 0.0
      %v924 = vsel %vm908, %v919, 0.0
      %v925 = vsel %vm909, %v921, 0.0
      %v926 = vadd.f32 %v814, %v922
      %v927 = vadd.f32 %v815, %v923
      %v928 = vadd.f32 %v816, %v924
      %v929 = vadd.f32 %v817, %v925
      %v930 = vadd.f32 %v818, %v915
      %v931 = vadd.f32 %v819, %v917
      %v932 = vadd.f32 %v820, %v919
      %v933 = vadd.f32 %v821, %v921
      %v934 = vrcp.pop %v930
      %v935 = vmul.f32 %v926, %v934
      %v936 = vrcp.pop %v931
      %v937 = vmul.f32 %v927, %v936
      %v938 = vrcp.pop %v932
      %v939 = vmul.f32 %v928, %v938
      %v940 = vrcp.pop %v933
      %v941 = vmul.f32 %v929, %v940
      %v943 = vsel %vm601, %v935, 0
      %v946 = vsel %vm601, %v937, 0
      %v949 = vsel %vm601, %v939, 0
      %v952 = vsel %vm601, %v941, 0
      %954 = vmatprep.subr.mxu0 0.0
      %955 = vmatpush1.msra.mxu0 %v454
      %956 = vmatprep.subr.mxu0 0.0
      %957 = vmatpush1.msra.mxu0 %v455
      %958 = vmatprep.subr.mxu0 0.0
      %959 = vmatpush1.msra.mxu0 0.0
      %960 = vmatprep.subr.mxu0 0.0
      %961 = vmatpush1.msra.mxu0 0.0
      %962 = vmatprep.subr.mxu0 0.0
      %963 = vmatpush1.msra.mxu0 0.0
      %964 = vmatprep.subr.mxu0 0.0
      %965 = vmatpush1.msra.mxu0 0.0
      %966 = vmatprep.subr.mxu0 0.0
      %967 = vmatpush1.msra.mxu0 0.0
      %968 = vmatprep.subr.mxu0 0.0
      %969 = vmatpush1.msra.mxu0 0.0
      %970 = vmatprep.subr.mxu0 0.0
      %971 = vmatpush1.msra.mxu0 0.0
      %972 = vmatprep.subr.mxu0 0.0
      %973 = vmatpush1.msra.mxu0 0.0
      %974 = vmatprep.subr.mxu0 0.0
      %975 = vmatpush1.msra.mxu0 0.0
      %976 = vmatprep.subr.mxu0 0.0
      %977 = vmatpush1.msra.mxu0 0.0
      %978 = vmatprep.subr.mxu0 0.0
      %979 = vmatpush1.msra.mxu0 0.0
      %980 = vmatprep.subr.mxu0 0.0
      %981 = vmatpush1.msra.mxu0 0.0
      %982 = vmatprep.subr.mxu0 0.0
      %983 = vmatpush1.msra.mxu0 0.0
      %984 = vmatprep.subr.mxu0 0.0
      %985 = vmatpush1.msra.mxu0 0.0
      %986 = vmatprep.subr.mxu0 0.0
      %987 = vmatpush1.msra.mxu0 0.0
      %988 = vmatprep.subr.mxu0 0.0
      %989 = vmatpush1.msra.mxu0 0.0
      %990 = vmatprep.subr.mxu0 0.0
      %991 = vmatpush1.msra.mxu0 0.0
      %992 = vmatprep.subr.mxu0 0.0
      %993 = vmatpush1.msra.mxu0 0.0
      %994 = vmatprep.subr.mxu0 0.0
      %995 = vmatpush1.msra.mxu0 0.0
      %996 = vmatprep.subr.mxu0 0.0
      %997 = vmatpush1.msra.mxu0 0.0
      %998 = vmatprep.subr.mxu0 0.0
      %999 = vmatpush1.msra.mxu0 0.0
      %1000 = vmatprep.subr.mxu0 0.0
      %1001 = vmatpush1.msra.mxu0 0.0
      %1002 = vmatprep.subr.mxu0 0.0
      %1003 = vmatpush1.msra.mxu0 0.0
      %1004 = vmatprep.subr.mxu0 0.0
      %1005 = vmatpush1.msra.mxu0 0.0
      %1006 = vmatprep.subr.mxu0 0.0
      %1007 = vmatpush1.msra.mxu0 0.0
      %1008 = vmatprep.subr.mxu0 0.0
      %1009 = vmatpush1.msra.mxu0 0.0
      %1010 = vmatprep.subr.mxu0 0.0
      %1011 = vmatpush1.msra.mxu0 0.0
      %1012 = vmatprep.subr.mxu0 0.0
      %1013 = vmatpush1.msra.mxu0 0.0
      %1014 = vmatprep.subr.mxu0 0.0
      %1015 = vmatpush1.msra.mxu0 0.0
      %1016 = vmatprep.subr.mxu0 0.0
      %1017 = vmatpush1.msra.mxu0 0.0
      %1018 = vmatprep.mubr.f32.mxu0 0.0
      %1019 = vmatmul.mubr.f32.gmra.mrb[0].mxu0 %v943
      %v1020 = vpop.f32.mrb[0].mxu0
      %v1021 = vadd.f32 0.0, %v1020
      %v1022 = vpop.f32.mrb[0].mxu0
      %1023 = vmatprep.mubr.f32.mxu0 0.0
      %1024 = vmatmul.mubr.f32.gmra.mrb[0].mxu0 %v946
      %v1025 = vpop.f32.mrb[0].mxu0
      %v1026 = vadd.f32 0.0, %v1025
      %v1027 = vpop.f32.mrb[0].mxu0
      %1028 = vmatprep.mubr.f32.mxu0 0.0
      %1029 = vmatmul.mubr.f32.gmra.mrb[0].mxu0 %v949
      %v1030 = vpop.f32.mrb[0].mxu0
      %v1031 = vadd.f32 0.0, %v1030
      %v1032 = vpop.f32.mrb[0].mxu0
      %1033 = vmatprep.mubr.f32.mxu0 0.0
      %1034 = vmatmul.mubr.f32.gmra.mrb[0].mxu0 %v952
      %v1035 = vpop.f32.mrb[0].mxu0
      %v1036 = vadd.f32 0.0, %v1035
      %v1037 = vpop.f32.mrb[0].mxu0
      %1038 = vdwg.mxu0
      %v1039 = vld [vmem:[%s4] sm:$0xff]
      %v1040 = vld [vmem:[%s4 + $0x8] sm:$0xff]
      %v1041 = vld [vmem:[%s5] sm:$0xff]
      %v1042 = vld [vmem:[%s5 + $0x8] sm:$0xff]
      %v1043 = vld [vmem:[%s6] sm:$0x1]
      %v1045 = vsel %vm601, %v1021, 0
      %v1048 = vsel %vm601, %v1026, 0
      %v1051 = vsel %vm601, %v1031, 0
      %v1054 = vsel %vm601, %v1036, 0
      %1056 = vmatprep.subr.mxu0 0.0
      %1057 = vmatpush1.msra.mxu0 %v1041
      %1058 = vmatprep.subr.mxu0 0.0
      %1059 = vmatpush1.msra.mxu0 %v1042
      %1060 = vmatprep.subr.mxu0 0.0
      %1061 = vmatpush1.msra.mxu0 0.0
      %1062 = vmatprep.subr.mxu0 0.0
      %1063 = vmatpush1.msra.mxu0 0.0
      %1064 = vmatprep.subr.mxu0 0.0
      %1065 = vmatpush1.msra.mxu0 0.0
      %1066 = vmatprep.subr.mxu0 0.0
      %1067 = vmatpush1.msra.mxu0 0.0
      %1068 = vmatprep.subr.mxu0 0.0
      %1069 = vmatpush1.msra.mxu0 0.0
      %1070 = vmatprep.subr.mxu0 0.0
      %1071 = vmatpush1.msra.mxu0 0.0
      %1072 = vmatprep.subr.mxu0 0.0
      %1073 = vmatpush1.msra.mxu0 0.0
      %1074 = vmatprep.subr.mxu0 0.0
      %1075 = vmatpush1.msra.mxu0 0.0
      %1076 = vmatprep.subr.mxu0 0.0
      %1077 = vmatpush1.msra.mxu0 0.0
      %1078 = vmatprep.subr.mxu0 0.0
      %1079 = vmatpush1.msra.mxu0 0.0
      %1080 = vmatprep.subr.mxu0 0.0
      %1081 = vmatpush1.msra.mxu0 0.0
      %1082 = vmatprep.subr.mxu0 0.0
      %1083 = vmatpush1.msra.mxu0 0.0
      %1084 = vmatprep.subr.mxu0 0.0
      %1085 = vmatpush1.msra.mxu0 0.0
      %1086 = vmatprep.subr.mxu0 0.0
      %1087 = vmatpush1.msra.mxu0 0.0
      %1088 = vmatprep.subr.mxu0 0.0
      %1089 = vmatpush1.msra.mxu0 0.0
      %1090 = vmatprep.subr.mxu0 0.0
      %1091 = vmatpush1.msra.mxu0 0.0
      %1092 = vmatprep.subr.mxu0 0.0
      %1093 = vmatpush1.msra.mxu0 0.0
      %1094 = vmatprep.subr.mxu0 0.0
      %1095 = vmatpush1.msra.mxu0 0.0
      %1096 = vmatprep.subr.mxu0 0.0
      %1097 = vmatpush1.msra.mxu0 0.0
      %1098 = vmatprep.subr.mxu0 0.0
      %1099 = vmatpush1.msra.mxu0 0.0
      %1100 = vmatprep.subr.mxu0 0.0
      %1101 = vmatpush1.msra.mxu0 0.0
      %1102 = vmatprep.subr.mxu0 0.0
      %1103 = vmatpush1.msra.mxu0 0.0
      %1104 = vmatprep.subr.mxu0 0.0
      %1105 = vmatpush1.msra.mxu0 0.0
      %1106 = vmatprep.subr.mxu0 0.0
      %1107 = vmatpush1.msra.mxu0 0.0
      %1108 = vmatprep.subr.mxu0 0.0
      %1109 = vmatpush1.msra.mxu0 0.0
      %1110 = vmatprep.subr.mxu0 0.0
      %1111 = vmatpush1.msra.mxu0 0.0
      %1112 = vmatprep.subr.mxu0 0.0
      %1113 = vmatpush1.msra.mxu0 0.0
      %1114 = vmatprep.subr.mxu0 0.0
      %1115 = vmatpush1.msra.mxu0 0.0
      %1116 = vmatprep.subr.mxu0 0.0
      %1117 = vmatpush1.msra.mxu0 0.0
      %1118 = vmatprep.subr.mxu0 0.0
      %1119 = vmatpush1.msra.mxu0 0.0
      %1120 = vmatprep.mubr.f32.mxu0 0.0
      %1121 = vmatmul.mubr.f32.gmra.mrb[0].mxu0 %v1045
      %v1122 = vpop.f32.mrb[0].mxu0
      %v1123 = vadd.f32 0.0, %v1122
      %v1124 = vpop.f32.mrb[0].mxu0
      %1125 = vmatprep.mubr.f32.mxu0 0.0
      %1126 = vmatmul.mubr.f32.gmra.mrb[0].mxu0 %v1048
      %v1127 = vpop.f32.mrb[0].mxu0
      %v1128 = vadd.f32 0.0, %v1127
      %v1129 = vpop.f32.mrb[0].mxu0
      %1130 = vmatprep.mubr.f32.mxu0 0.0
      %1131 = vmatmul.mubr.f32.gmra.mrb[0].mxu0 %v1051
      %v1132 = vpop.f32.mrb[0].mxu0
      %v1133 = vadd.f32 0.0, %v1132
      %v1134 = vpop.f32.mrb[0].mxu0
      %1135 = vmatprep.mubr.f32.mxu0 0.0
      %1136 = vmatmul.mubr.f32.gmra.mrb[0].mxu0 %v1054
      %v1137 = vpop.f32.mrb[0].mxu0
      %v1138 = vadd.f32 0.0, %v1137
      %v1139 = vpop.f32.mrb[0].mxu0
      %1140 = vdwg.mxu0
      %v1142 = vsel %vm601, %v450, 0
      %v1145 = vsel %vm601, %v451, 0
      %v1148 = vsel %vm601, %v452, 0
      %v1151 = vsel %vm601, %v453, 0
      %1153 = vmatprep.subr.mxu0 0.0
      %1154 = vmatpush1.msra.mxu0 %v1039
      %1155 = vmatprep.subr.mxu0 0.0
      %1156 = vmatpush1.msra.mxu0 %v1040
      %1157 = vmatprep.subr.mxu0 0.0
      %1158 = vmatpush1.msra.mxu0 0.0
      %1159 = vmatprep.subr.mxu0 0.0
      %1160 = vmatpush1.msra.mxu0 0.0
      %1161 = vmatprep.subr.mxu0 0.0
      %1162 = vmatpush1.msra.mxu0 0.0
      %1163 = vmatprep.subr.mxu0 0.0
      %1164 = vmatpush1.msra.mxu0 0.0
      %1165 = vmatprep.subr.mxu0 0.0
      %1166 = vmatpush1.msra.mxu0 0.0
      %1167 = vmatprep.subr.mxu0 0.0
      %1168 = vmatpush1.msra.mxu0 0.0
      %1169 = vmatprep.subr.mxu0 0.0
      %1170 = vmatpush1.msra.mxu0 0.0
      %1171 = vmatprep.subr.mxu0 0.0
      %1172 = vmatpush1.msra.mxu0 0.0
      %1173 = vmatprep.subr.mxu0 0.0
      %1174 = vmatpush1.msra.mxu0 0.0
      %1175 = vmatprep.subr.mxu0 0.0
      %1176 = vmatpush1.msra.mxu0 0.0
      %1177 = vmatprep.subr.mxu0 0.0
      %1178 = vmatpush1.msra.mxu0 0.0
      %1179 = vmatprep.subr.mxu0 0.0
      %1180 = vmatpush1.msra.mxu0 0.0
      %1181 = vmatprep.subr.mxu0 0.0
      %1182 = vmatpush1.msra.mxu0 0.0
      %1183 = vmatprep.subr.mxu0 0.0
      %1184 = vmatpush1.msra.mxu0 0.0
      %1185 = vmatprep.subr.mxu0 0.0
      %1186 = vmatpush1.msra.mxu0 0.0
      %1187 = vmatprep.subr.mxu0 0.0
      %1188 = vmatpush1.msra.mxu0 0.0
      %1189 = vmatprep.subr.mxu0 0.0
      %1190 = vmatpush1.msra.mxu0 0.0
      %1191 = vmatprep.subr.mxu0 0.0
      %1192 = vmatpush1.msra.mxu0 0.0
      %1193 = vmatprep.subr.mxu0 0.0
      %1194 = vmatpush1.msra.mxu0 0.0
      %1195 = vmatprep.subr.mxu0 0.0
      %1196 = vmatpush1.msra.mxu0 0.0
      %1197 = vmatprep.subr.mxu0 0.0
      %1198 = vmatpush1.msra.mxu0 0.0
      %1199 = vmatprep.subr.mxu0 0.0
      %1200 = vmatpush1.msra.mxu0 0.0
      %1201 = vmatprep.subr.mxu0 0.0
      %1202 = vmatpush1.msra.mxu0 0.0
      %1203 = vmatprep.subr.mxu0 0.0
      %1204 = vmatpush1.msra.mxu0 0.0
      %1205 = vmatprep.subr.mxu0 0.0
      %1206 = vmatpush1.msra.mxu0 0.0
      %1207 = vmatprep.subr.mxu0 0.0
      %1208 = vmatpush1.msra.mxu0 0.0
      %1209 = vmatprep.subr.mxu0 0.0
      %1210 = vmatpush1.msra.mxu0 0.0
      %1211 = vmatprep.subr.mxu0 0.0
      %1212 = vmatpush1.msra.mxu0 0.0
      %1213 = vmatprep.subr.mxu0 0.0
      %1214 = vmatpush1.msra.mxu0 0.0
      %1215 = vmatprep.subr.mxu0 0.0
      %1216 = vmatpush1.msra.mxu0 0.0
      %1217 = vmatprep.mubr.f32.mxu0 0.0
      %1218 = vmatmul.mubr.f32.gmra.mrb[0].mxu0 %v1142
      %v1219 = vpop.f32.mrb[0].mxu0
      %v1220 = vadd.f32 %v1123, %v1219
      %v1221 = vpop.f32.mrb[0].mxu0
      %1222 = vmatprep.mubr.f32.mxu0 0.0
      %1223 = vmatmul.mubr.f32.gmra.mrb[0].mxu0 %v1145
      %v1224 = vpop.f32.mrb[0].mxu0
      %v1225 = vadd.f32 %v1128, %v1224
      %v1226 = vpop.f32.mrb[0].mxu0
      %1227 = vmatprep.mubr.f32.mxu0 0.0
      %1228 = vmatmul.mubr.f32.gmra.mrb[0].mxu0 %v1148
      %v1229 = vpop.f32.mrb[0].mxu0
      %v1230 = vadd.f32 %v1133, %v1229
      %v1231 = vpop.f32.mrb[0].mxu0
      %1232 = vmatprep.mubr.f32.mxu0 0.0
      %1233 = vmatmul.mubr.f32.gmra.mrb[0].mxu0 %v1151
      %v1234 = vpop.f32.mrb[0].mxu0
      %v1235 = vadd.f32 %v1138, %v1234
      %v1236 = vpop.f32.mrb[0].mxu0
      %1237 = vdwg.mxu0
      %v1239 = vlaneseq
      %v1240 = vshrl.u32 %v1239, 7
      %v1241 = vsub.s32 0, %v1240
      %v1242 = vrot.slane %v1043, %v1241
      %v1244 = vadd.f32 %v1220, %v1242
      %v1245 = vadd.f32 %v1225, %v1242
      %v1246 = vadd.f32 %v1230, %v1242
      %v1247 = vadd.f32 %v1235, %v1242
      %v1248 = vmax.f32 %v1244, 0.0
      %v1249 = vmax.f32 %v1245, 0.0
      %v1250 = vmax.f32 %v1246, 0.0
      %v1251 = vmax.f32 %v1247, 0.0
      %v1252 = vld [vmem:[%s7] sm:$0xff]
      %v1253 = vld [vmem:[%s7 + $0x8] sm:$0xff]
      %v1254 = vld [vmem:[%s7 + $0x10] sm:$0xff]
      %v1255 = vld [vmem:[%s7 + $0x18] sm:$0xff]
      %v1256 = vld [vmem:[%s8] sm:$0x1]
      %v1258 = vlaneseq
      %v1259 = vshrl.u32 %v1258, 7
      %v1260 = vsub.s32 0, %v1259
      %v1261 = vrot.slane %v1256, %v1260
      %vm1263 = vcmask 261120
      %v1265 = vsel %vm1263, %v1248, 0
      %v1268 = vsel %vm1263, %v1249, 0
      %v1271 = vsel %vm1263, %v1250, 0
      %v1274 = vsel %vm1263, %v1251, 0
      %1276 = vmatprep.subr.mxu0 0.0
      %1277 = vmatpush1.msra.mxu0 %v1252
      %1278 = vmatprep.subr.mxu0 0.0
      %1279 = vmatpush1.msra.mxu0 %v1253
      %1280 = vmatprep.subr.mxu0 0.0
      %1281 = vmatpush1.msra.mxu0 %v1254
      %1282 = vmatprep.subr.mxu0 0.0
      %1283 = vmatpush1.msra.mxu0 %v1255
      %1284 = vmatprep.subr.mxu0 0.0
      %1285 = vmatpush1.msra.mxu0 0.0
      %1286 = vmatprep.subr.mxu0 0.0
      %1287 = vmatpush1.msra.mxu0 0.0
      %1288 = vmatprep.subr.mxu0 0.0
      %1289 = vmatpush1.msra.mxu0 0.0
      %1290 = vmatprep.subr.mxu0 0.0
      %1291 = vmatpush1.msra.mxu0 0.0
      %1292 = vmatprep.subr.mxu0 0.0
      %1293 = vmatpush1.msra.mxu0 0.0
      %1294 = vmatprep.subr.mxu0 0.0
      %1295 = vmatpush1.msra.mxu0 0.0
      %1296 = vmatprep.subr.mxu0 0.0
      %1297 = vmatpush1.msra.mxu0 0.0
      %1298 = vmatprep.subr.mxu0 0.0
      %1299 = vmatpush1.msra.mxu0 0.0
      %1300 = vmatprep.subr.mxu0 0.0
      %1301 = vmatpush1.msra.mxu0 0.0
      %1302 = vmatprep.subr.mxu0 0.0
      %1303 = vmatpush1.msra.mxu0 0.0
      %1304 = vmatprep.subr.mxu0 0.0
      %1305 = vmatpush1.msra.mxu0 0.0
      %1306 = vmatprep.subr.mxu0 0.0
      %1307 = vmatpush1.msra.mxu0 0.0
      %1308 = vmatprep.subr.mxu0 0.0
      %1309 = vmatpush1.msra.mxu0 0.0
      %1310 = vmatprep.subr.mxu0 0.0
      %1311 = vmatpush1.msra.mxu0 0.0
      %1312 = vmatprep.subr.mxu0 0.0
      %1313 = vmatpush1.msra.mxu0 0.0
      %1314 = vmatprep.subr.mxu0 0.0
      %1315 = vmatpush1.msra.mxu0 0.0
      %1316 = vmatprep.subr.mxu0 0.0
      %1317 = vmatpush1.msra.mxu0 0.0
      %1318 = vmatprep.subr.mxu0 0.0
      %1319 = vmatpush1.msra.mxu0 0.0
      %1320 = vmatprep.subr.mxu0 0.0
      %1321 = vmatpush1.msra.mxu0 0.0
      %1322 = vmatprep.subr.mxu0 0.0
      %1323 = vmatpush1.msra.mxu0 0.0
      %1324 = vmatprep.subr.mxu0 0.0
      %1325 = vmatpush1.msra.mxu0 0.0
      %1326 = vmatprep.subr.mxu0 0.0
      %1327 = vmatpush1.msra.mxu0 0.0
      %1328 = vmatprep.subr.mxu0 0.0
      %1329 = vmatpush1.msra.mxu0 0.0
      %1330 = vmatprep.subr.mxu0 0.0
      %1331 = vmatpush1.msra.mxu0 0.0
      %1332 = vmatprep.subr.mxu0 0.0
      %1333 = vmatpush1.msra.mxu0 0.0
      %1334 = vmatprep.subr.mxu0 0.0
      %1335 = vmatpush1.msra.mxu0 0.0
      %1336 = vmatprep.subr.mxu0 0.0
      %1337 = vmatpush1.msra.mxu0 0.0
      %1338 = vmatprep.subr.mxu0 0.0
      %1339 = vmatpush1.msra.mxu0 0.0
      %1340 = vmatprep.mubr.f32.mxu0 0.0
      %1341 = vmatmul.mubr.f32.gmra.mrb[0].mxu0 %v1265
      %v1342 = vpop.f32.mrb[0].mxu0
      %v1343 = vadd.f32 %v1261, %v1342
      %v1344 = vpop.f32.mrb[0].mxu0
      %1345 = vmatprep.mubr.f32.mxu0 0.0
      %1346 = vmatmul.mubr.f32.gmra.mrb[0].mxu0 %v1268
      %v1347 = vpop.f32.mrb[0].mxu0
      %v1348 = vadd.f32 %v1261, %v1347
      %v1349 = vpop.f32.mrb[0].mxu0
      %1350 = vmatprep.mubr.f32.mxu0 0.0
      %1351 = vmatmul.mubr.f32.gmra.mrb[0].mxu0 %v1271
      %v1352 = vpop.f32.mrb[0].mxu0
      %v1353 = vadd.f32 %v1261, %v1352
      %v1354 = vpop.f32.mrb[0].mxu0
      %1355 = vmatprep.mubr.f32.mxu0 0.0
      %1356 = vmatmul.mubr.f32.gmra.mrb[0].mxu0 %v1274
      %v1357 = vpop.f32.mrb[0].mxu0
      %v1358 = vadd.f32 %v1261, %v1357
      %v1359 = vpop.f32.mrb[0].mxu0
      %1360 = vdwg.mxu0
      %v1361 = vmax.f32 %v1343, 0.0
      %v1362 = vmax.f32 %v1348, 0.0
      %v1363 = vmax.f32 %v1353, 0.0
      %v1364 = vmax.f32 %v1358, 0.0
      %1365 = vst.msk [vmem:[%s443] sm:$0xff] %vm601, %v1361
      %1366 = vst.msk [vmem:[%s443 + $0x8] sm:$0xff] %vm601, %v1362
      %1367 = vst.msk [vmem:[%s443 + $0x10] sm:$0xff] %vm601, %v1363
      %1368 = vst.msk [vmem:[%s443 + $0x18] sm:$0xff] %vm601, %v1364
      %s1369 = smul.u32 4, %s25
      %p1370 = scmp.lt.s32.totalorder %s24, 1
      %s1371 = scalar_select %p1370, %s24, 1
      %p1372 = scmp.lt.s32.totalorder %s1369, 7
      %s1373 = scalar_select %p1372, %s1369, 7
      %s1374 = smul.addr %s1371, 8
      %s1375 = sadd.s32 %s1373, %s1374
      %s1376 = smul.addr %s1375, 8
      %s1377 = scalar_lea.vmem %s9, %s1376
      // Predicated region
      $region57: #{tpu_custom_call.1} parent=55 // pred_check
        %p1378 = pneg %p265
      $region58: #{tpu_custom_call.1} parent=55 // pred_check_branch
        %1380 = sbr.rel (%p1378) target = $region60
      $region59: #{tpu_custom_call.1} parent=55 // pred_region
        %s1381 = smul.u32 4, %s25
      $region60: #{tpu_custom_call.1} parent=55 // pred_fallthru
        _
    $region56: #{tpu_custom_call.1} parent=5 // pred_fallthru
      _
    %p1382 = scmp.le.s32.totalorder 2, %s15
    // Predicated region
    $region61: #{tpu_custom_call.1} parent=5 // pred_check
      %p1383 = pneg %p1382
    $region62: #{tpu_custom_call.1} parent=5 // pred_check_branch
      %1385 = sbr.rel (%p1383) target = $region64
    $region63: #{tpu_custom_call.1} parent=5 // pred_region
      %s1386 = ssub.s32 %s15, 2
      // Predicated region
      $region65: #{tpu_custom_call.1} parent=63 // pred_check
        %p1387 = pneg %p271
      $region66: #{tpu_custom_call.1} parent=63 // pred_check_branch
        %1389 = sbr.rel (%p1387) target = $region68
      $region67: #{tpu_custom_call.1} parent=63 // pred_region
        %s1390 = smul.u32 4, %s27
        %p1391 = scmp.lt.s32.totalorder %s26, 1
        %s1392 = scalar_select %p1391, %s26, 1
        %p1393 = scmp.lt.s32.totalorder %s1390, 7
        %s1394 = scalar_select %p1393, %s1390, 7
        %s1395 = smul.addr %s1392, 8
        %s1396 = sadd.s32 %s1394, %s1395
        %s1397 = smul.addr %s1396, 8
        %s1398 = scalar_lea.vmem %s9, %s1397
      $region68: #{tpu_custom_call.1} parent=63 // pred_fallthru
        _
    $region64: #{tpu_custom_call.1} parent=5 // pred_fallthru
      _
  $region6: #{tpu_custom_call.1} parent=0 // loop_footer
    %s19 = sadd.s32 1, %s15
  $region7: #{tpu_custom_call.1} parent=0 // loop_footer_branch
    %14 = sbr.rel target = $region3
  $region8: #{tpu_custom_call.1} parent=0 // loop_exit
    _

</llo_original>
